<compile_context>
chip_gen: v7x
topology: tpu7x:2x2x1
jax: 0.10.0
libtpu: 0.0.40
codegen_flags: <defaults>
</compile_context>

<pallas_src>
import functools

import jax
import jax.numpy as jnp
import numpy as np
from jax.experimental import pallas as pl
from jax.experimental.pallas import tpu as pltpu

FOCAL_ALPHA = 0.25
FOCAL_GAMMA = 2.0   # exploited as an explicit square inside the kernel

VMEM_LIMIT_BYTES = 48 * 1024 * 1024   # safe on v5e/v6e (128 MiB) and v7x (64 MiB)


# ----------------------------- in-kernel helpers ---------------------------- #

def _cheap_sigmoid(x):
    """sigmoid(x) via one exp + one approx reciprocal; also returns exp(-|x|)."""
    e = jnp.exp(-jnp.abs(x))
    inv = pl.reciprocal(1.0 + e, approx=True)
    prob = jnp.where(x >= 0.0, inv, e * inv)
    return prob, e


def _exact_sigmoid(x):
    """Numerically-stable exact sigmoid (feeds H*W-pixel sums -> keep exact)."""
    e = jnp.exp(-jnp.abs(x))
    inv = 1.0 / (1.0 + e)
    return jnp.where(x >= 0.0, inv, e * inv)


def _resize_block(src, ah, awt, w_first):
    """Bilinear-resize a (M, h_in, w_in) bf16 block to (M, h_tile, w_out) f32.

    up[m] = A_h_tile @ src[m] @ A_w^T.  A_h is passed once as a 2D (h_tile,
    h_in) matrix and broadcast in-kernel (no HBM/DMA replication); the W
    contraction is a single large 2D GEMM.  `w_first` (static) picks the
    cheaper contraction order; when h-row tiling is active the H-first order
    is forced by the caller so no W-GEMM work is repeated across h tiles.
    """
    m, h_in, w_in = src.shape
    h_tile = ah.shape[0]
    w_out = awt.shape[1]
    ah_b = jnp.broadcast_to(ah[None], (m, h_tile, h_in))
    if w_first:
        tmp = jnp.dot(src.reshape(m * h_in, w_in), awt,
                      preferred_element_type=jnp.float32)
        tmp = tmp.reshape(m, h_in, w_out).astype(jnp.bfloat16)
        return jnp.einsum('mhp,mpw->mhw', ah_b, tmp,
                          preferred_element_type=jnp.float32)
    tmp = jnp.einsum('mhp,mpq->mhq', ah_b, src,
                     preferred_element_type=jnp.float32).astype(jnp.bfloat16)
    return jnp.dot(tmp.reshape(m * h_tile, w_in), awt,
                   preferred_element_type=jnp.float32).reshape(m, h_tile, w_out)


# ----------------------------- Pallas kernels ------------------------------ #

def _focal_kernel(src_ref, sem_ref, ah_ref, awt_ref, out_ref, acc_ref, *,
                  tm, num_classes, c_pad, inv_hw, w_first):
    """Grid = (B, C_pad//TM, H//h_tile); per-(b, class-block) partial sums."""
    ci = pl.program_id(1)
    hi = pl.program_id(2)

    @pl.when(hi == 0)
    def _():
        acc_ref[...] = jnp.zeros_like(acc_ref)

    # (TM, h_tile, W) f32 upsampled logits for this row tile.
    x = _resize_block(src_ref[0], ah_ref[...], awt_ref[...], w_first)

    # One-hot target built in-kernel from the raw semantic map (int16 stream).
    sem = sem_ref[0].astype(jnp.int32)                            # (h_tile, W)
    cls = (ci * tm +
           jax.lax.broadcasted_iota(jnp.int32, (tm, 1), 0))[:, :, None]  # (TM,1,1)
    sem_b = sem[None, :, :]
    t = jnp.where(jnp.logical_and(sem_b == cls, sem_b != 255), 1.0, 0.0)

    # Sigmoid focal loss, transcendental-lean (gamma == 2 -> explicit square).
    prob, e = _cheap_sigmoid(x)
    ce = jnp.maximum(x, 0.0) - x * t + jnp.log(1.0 + e)
    p_t = prob * t + (1.0 - prob) * (1.0 - t)
    one_m_pt = 1.0 - p_t
    alpha_t = FOCAL_ALPHA * t + (1.0 - FOCAL_ALPHA) * (1.0 - t)
    loss = alpha_t * ce * one_m_pt * one_m_pt

    # Sum over the mask axis = pure vreg adds into the row-tile accumulator.
    if c_pad == num_classes:
        acc_ref[...] += jnp.sum(loss, axis=0)
    else:
        last_c = pl.num_programs(1) - 1

        @pl.when(ci != last_c)
        def _():
            acc_ref[...] += jnp.sum(loss, axis=0)

        @pl.when(ci == last_c)   # only the last class block has padded channels
        def _():
            acc_ref[...] += jnp.sum(jnp.where(cls < num_classes, loss, 0.0), axis=0)

    @pl.when(hi == pl.num_programs(2) - 1)
    def _():
        out_ref[...] = (jnp.sum(acc_ref[...]) * inv_hw).reshape(1, 1, 1, 1)


def _tversky_kernel(src_ref, tgt_ref, ah_ref, awt_ref, out_ref,
                    spt_ref, st_ref, sp_ref, *,
                    tmv, num_valid, alpha, beta, w_first):
    """Grid = (M_pad//TMv, H//h_tile); per-mask-block partial loss sums."""
    i = pl.program_id(0)
    hi = pl.program_id(1)

    @pl.when(hi == 0)
    def _():
        spt_ref[...] = jnp.zeros_like(spt_ref)
        st_ref[...] = jnp.zeros_like(st_ref)
        sp_ref[...] = jnp.zeros_like(sp_ref)

    x = _resize_block(src_ref[...], ah_ref[...], awt_ref[...], w_first)
    p = _exact_sigmoid(x)                                       # (TMv, h_tile, Wt)
    tgt = tgt_ref[...].astype(jnp.float32)                      # 0/1, bf16 stream

    def sum_hw(v):                                              # -> (TMv, 1)
        # H first (mostly VPU cross-vreg adds), then a small lane reduce.
        return jnp.sum(jnp.sum(v, axis=1), axis=-1, keepdims=True)

    spt_ref[...] += sum_hw(p * tgt)
    st_ref[...] += sum_hw(tgt)
    sp_ref[...] += sum_hw(p)

    @pl.when(hi == pl.num_programs(1) - 1)
    def _():
        tp = spt_ref[...]
        fn = st_ref[...] - tp
        fp = sp_ref[...] - tp
        tv = (tp + 1.0) / (tp + alpha * fp + beta * fn + 1.0)
        midx = i * tmv + jax.lax.broadcasted_iota(jnp.int32, (tmv, 1), 0)
        loss = jnp.where(midx < num_valid, 1.0 - tv, 0.0)       # (TMv, 1)
        out_ref[...] = jnp.sum(loss).reshape(1, 1, 1)


# ------------------------------ JAX glue ----------------------------------- #

@functools.lru_cache(maxsize=None)
def bilinear_matrix(out_size, in_size):
    """Dense matrix equivalent of F.interpolate(mode='bilinear', align_corners=False)."""
    i = np.arange(out_size, dtype=np.float64)
    s = (i + 0.5) * (in_size / out_size) - 0.5
    s = np.clip(s, 0.0, in_size - 1.0)
    i0 = np.clip(np.floor(s).astype(np.int64), 0, in_size - 1)
    i1 = np.clip(i0 + 1, 0, in_size - 1)
    w1 = s - i0
    w0 = 1.0 - w1
    a = np.zeros((out_size, in_size), dtype=np.float32)
    np.add.at(a, (np.arange(out_size), i0), w0)
    np.add.at(a, (np.arange(out_size), i1), w1)
    return jnp.asarray(a)


def _round_up(x, m):
    return -(-x // m) * m


def _pick_w_first(h_in, w_in, h_out, w_out):
    # FLOP cost per mask of (src @ A_w^T) then A_h  vs  A_h first.
    return h_in * w_out * (w_in + h_out) <= h_out * w_in * (h_in + w_out)


def _pick_h_tile(h_out, w_out, tm, n_temps, budget_bytes=12 << 20):
    """Largest multiple-of-16 divisor of h_out keeping live f32 temps in budget."""
    per_row = tm * w_out * 4 * n_temps + 1
    max_rows = max(16, budget_bytes // per_row)
    if h_out <= max_rows:
        return h_out
    divs = [d for d in range(16, h_out, 16) if h_out % d == 0]
    if not divs:
        return h_out
    fitting = [d for d in divs if d <= max_rows]
    return max(fitting) if fitting else min(divs)


def _resize_matrices(h_in, w_in, h_out, w_out):
    ah = bilinear_matrix(h_out, h_in).astype(jnp.bfloat16)        # (h_out, h_in)
    awt = bilinear_matrix(w_out, w_in).T.astype(jnp.bfloat16)     # (w_in, w_out)
    return ah, awt


def sigmoid_focal_loss_sum(pred_masks, sem, *, block=16):
    """sum_n mean_pixels(focal_n) over all B*C class masks (Pallas)."""
    b, c, h_in, w_in = pred_masks.shape
    _, h_out, w_out = sem.shape
    tm = min(block, _round_up(c, 8))
    c_pad = _round_up(c, tm)
    if c_pad != c:
        pred_masks = jnp.pad(pred_masks, ((0, 0), (0, c_pad - c), (0, 0), (0, 0)))
    src = pred_masks.astype(jnp.bfloat16)
    sem16 = sem.astype(jnp.int16)
    ah, awt = _resize_matrices(h_in, w_in, h_out, w_out)

    h_tile = _pick_h_tile(h_out, w_out, tm, n_temps=12)
    n_h = h_out // h_tile
    w_first = _pick_w_first(h_in, w_in, h_out, w_out) if n_h == 1 else False
    n_cb = c_pad // tm

    kernel = functools.partial(
        _focal_kernel, tm=tm, num_classes=c, c_pad=c_pad,
        inv_hw=1.0 / float(h_out * w_out), w_first=w_first)
    out = pl.pallas_call(
        kernel,
        out_shape=jax.ShapeDtypeStruct((b, n_cb, 1, 1), jnp.float32),
        grid_spec=pltpu.PrefetchScalarGridSpec(
            num_scalar_prefetch=0,
            grid=(b, n_cb, n_h),
            in_specs=[
                pl.BlockSpec((1, tm, h_in, w_in), lambda bi, ci, hi: (bi, ci, 0, 0)),
                pl.BlockSpec((1, h_tile, w_out), lambda bi, ci, hi: (bi, hi, 0)),
                pl.BlockSpec((h_tile, h_in), lambda bi, ci, hi: (hi, 0)),
                pl.BlockSpec((w_in, w_out), lambda bi, ci, hi: (0, 0)),
            ],
            out_specs=pl.BlockSpec((1, 1, 1, 1), lambda bi, ci, hi: (bi, ci, 0, 0)),
            scratch_shapes=[pltpu.VMEM((h_tile, w_out), jnp.float32)],
        ),
        compiler_params=pltpu.CompilerParams(
            dimension_semantics=("parallel", "parallel", "arbitrary"),
            vmem_limit_bytes=VMEM_LIMIT_BYTES),
    )(src, sem16, ah, awt)
    return jnp.sum(out)


def tversky_loss_sum(src_masks, tgt_masks, *, alpha, beta, block=16):
    """sum_m (1 - tversky_index_m) over matched masks (Pallas)."""
    m, h_in, w_in = src_masks.shape
    _, h_out, w_out = tgt_masks.shape
    tmv = min(block, _round_up(max(m, 1), 8))
    m_pad = _round_up(max(m, 1), tmv)
    if m_pad != m:
        pad = ((0, m_pad - m), (0, 0), (0, 0))
        src_masks = jnp.pad(src_masks, pad)
        tgt_masks = jnp.pad(tgt_masks, pad)
    src = src_masks.astype(jnp.bfloat16)
    tgt = tgt_masks.astype(jnp.bfloat16)        # 0/1 exact; halves the HBM stream
    ah, awt = _resize_matrices(h_in, w_in, h_out, w_out)

    h_tile = _pick_h_tile(h_out, w_out, tmv, n_temps=8)
    n_h = h_out // h_tile
    w_first = _pick_w_first(h_in, w_in, h_out, w_out) if n_h == 1 else False
    n_mb = m_pad // tmv

    kernel = functools.partial(_tversky_kernel, tmv=tmv, num_valid=m,
                               alpha=alpha, beta=beta, w_first=w_first)
    out = pl.pallas_call(
        kernel,
        out_shape=jax.ShapeDtypeStruct((n_mb, 1, 1), jnp.float32),
        grid_spec=pltpu.PrefetchScalarGridSpec(
            num_scalar_prefetch=0,
            grid=(n_mb, n_h),
            in_specs=[
                pl.BlockSpec((tmv, h_in, w_in), lambda i, hi: (i, 0, 0)),
                pl.BlockSpec((tmv, h_tile, w_out), lambda i, hi: (i, hi, 0)),
                pl.BlockSpec((h_tile, h_in), lambda i, hi: (hi, 0)),
                pl.BlockSpec((w_in, w_out), lambda i, hi: (0, 0)),
            ],
            out_specs=pl.BlockSpec((1, 1, 1), lambda i, hi: (i, 0, 0)),
            scratch_shapes=[pltpu.VMEM((tmv, 1), jnp.float32)] * 3,
        ),
        compiler_params=pltpu.CompilerParams(
            dimension_semantics=("parallel", "arbitrary"),
            vmem_limit_bytes=VMEM_LIMIT_BYTES),
    )(src, tgt, ah, awt)
    return jnp.sum(out)


class SegPlusCriterionPallas:
    """JAX/Pallas re-implementation of SegPlusCriterion.forward ('masks' losses)."""

    def __init__(self, num_classes, weight_dict, losses,
                 eos_coef=0.1, alpha=0.5, beta=0.5, mask_block=16):
        self.num_classes = num_classes
        self.weight_dict = weight_dict
        self.losses = losses
        self.eos_coef = eos_coef
        self.alpha = alpha
        self.beta = beta
        # Masks processed per Pallas grid step (clamped to padded class count).
        # TODO(synk): keep 8 on v5e (128x128 MXU already full at TM=8).
        self.mask_block = mask_block
        ew = np.ones(num_classes + 1, np.float32)
        ew[-1] = eos_coef
        # deterministic buffer (unused by the mask losses, kept for parity)
        self.empty_weight = jnp.asarray(ew)

    # -------- target preparation (hoisted out of the aux_outputs loop) ------
    def _prepare_targets(self, targets):
        labels = [t['labels'] for t in targets]
        sem = jnp.stack([t['masks'] for t in targets], 0).astype(jnp.int16)
        batch_idx = jnp.concatenate(
            [jnp.full(lab.shape, i, jnp.int32) for i, lab in enumerate(labels)])
        src_idx = jnp.concatenate([lab.astype(jnp.int32) for lab in labels])
        tgt_idx = jnp.concatenate(
            [jnp.arange(lab.shape[0], dtype=jnp.int32) for lab in labels])
        # TODO(synk): nested_tensor_from_tensor_list padding is assumed uniform
        # (all targets share the same K, Ht, Wt), so a plain stack suffices.
        tmasks = jnp.stack([t['target_masks'] for t in targets], 0)
        tgt_tversky = tmasks[batch_idx, tgt_idx].astype(jnp.bfloat16)
        # TODO(synk): torch.distributed all_reduce of num_masks is a host-side
        # collective; single-host world_size=1 semantics are reproduced here.
        num_masks = max(float(sum(int(lab.shape[0]) for lab in labels)), 1.0)
        return dict(sem=sem, batch_idx=batch_idx, src_idx=src_idx,
                    tgt_tversky=tgt_tversky, num_masks=num_masks)

    def loss_masks(self, pred_masks, prep):
        focal_sum = sigmoid_focal_loss_sum(pred_masks, prep['sem'],
                                           block=self.mask_block)
        src_tv = pred_masks[prep['batch_idx'], prep['src_idx']].astype(jnp.float32)
        tversky_sum = tversky_loss_sum(src_tv, prep['tgt_tversky'],
                                       alpha=self.alpha, beta=self.beta,
                                       block=self.mask_block)
        nm = prep['num_masks']
        return {'loss_mask': focal_sum / nm, 'loss_tversky': tversky_sum / nm}

    def forward(self, outputs, targets):
        for loss in self.losses:
            assert loss == 'masks', f'do you really want to compute {loss} loss?'
        prep = self._prepare_targets(targets)
        losses = dict(self.loss_masks(outputs['pred_masks'], prep))
        if 'aux_outputs' in outputs:
            for i, aux in enumerate(outputs['aux_outputs']):
                l_dict = self.loss_masks(aux['pred_masks'], prep)
                losses.update({k + f'_{i}': v for k, v in l_dict.items()})
        return losses


# ------------------------- plain-JAX reference ------------------------------ #

def _reference_losses(pred_masks, targets, alpha, beta):
    b, c, h_in, w_in = pred_masks.shape
    h, w = targets[0]['masks'].shape
    sem = jnp.stack([t['masks'] for t in targets], 0).astype(jnp.int32)
    valid = (sem != 255)
    oh = jax.nn.one_hot(jnp.where(valid, sem, 0), c, dtype=jnp.float32)
    oh = oh * valid[..., None].astype(jnp.float32)
    tgt_bce = jnp.transpose(oh, (0, 3, 1, 2)).reshape(b * c, h * w)

    ah, aw = bilinear_matrix(h, h_in), bilinear_matrix(w, w_in)
    up = jnp.einsum('hp,npq,wq->nhw', ah,
                    pred_masks.reshape(b * c, h_in, w_in).astype(jnp.float32), aw)
    x = up.reshape(b * c, -1)
    t = tgt_bce
    ce = jnp.maximum(x, 0.0) - x * t + jnp.log(1.0 + jnp.exp(-jnp.abs(x)))
    prob = jax.nn.sigmoid(x)
    p_t = prob * t + (1 - prob) * (1 - t)
    fl = (FOCAL_ALPHA * t + (1 - FOCAL_ALPHA) * (1 - t)) * ce * (1 - p_t) ** 2
    num_masks = max(float(sum(int(t_['labels'].shape[0]) for t_ in targets)), 1.0)
    loss_mask = fl.mean(1).sum() / num_masks

    batch_idx = jnp.concatenate([jnp.full(t_['labels'].shape, i, jnp.int32)
                                 for i, t_ in enumerate(targets)])
    src_idx = jnp.concatenate([t_['labels'].astype(jnp.int32) for t_ in targets])
    tgt_idx = jnp.concatenate([jnp.arange(t_['labels'].shape[0], dtype=jnp.int32)
                               for t_ in targets])
    src_tv = pred_masks[batch_idx, src_idx].astype(jnp.float32)
    tmasks = jnp.stack([t_['target_masks'] for t_ in targets], 0)
    tgt_tv = tmasks[batch_idx, tgt_idx].astype(jnp.float32)
    ht, wt = tgt_tv.shape[-2:]
    ah2, aw2 = bilinear_matrix(ht, h_in), bilinear_matrix(wt, w_in)
    up2 = jnp.einsum('hp,npq,wq->nhw', ah2, src_tv, aw2)
    p = jax.nn.sigmoid(up2.reshape(up2.shape[0], -1))
    tt = tgt_tv.reshape(tgt_tv.shape[0], -1)
    tp = (p * tt).sum(-1)
    fn = ((1 - p) * tt).sum(-1)
    fp = (p * (1 - tt)).sum(-1)
    ti = (tp + 1) / (tp + alpha * fp + beta * fn + 1)
    loss_tversky = (1 - ti).sum() / num_masks
    return {'loss_mask': loss_mask, 'loss_tversky': loss_tversky}


# --------------------------------- main ------------------------------------- #

if __name__ == "__main__":
    key = jax.random.PRNGKey(0)
    B, C = 2, 4            # batch, num_classes (mask channels)
    H_, W_ = 16, 16        # predicted mask resolution
    H, W = 32, 32          # ground-truth resolution
    K = 3                  # matched masks per image

    k1, k2, k3 = jax.random.split(key, 3)
    pred_masks = jax.random.normal(k1, (B, C, H_, W_), jnp.float32)
    # semantic map with classes 0..C-1 plus some 255 (ignore) pixels
    sem = jax.random.randint(k2, (B, H, W), 0, C + 1)
    sem = jnp.where(sem == C, 255, sem).astype(jnp.int32)
    tmask = (jax.random.uniform(k3, (B, K, H, W)) > 0.5).astype(jnp.float32)

    targets = []
    for b in range(B):
        targets.append({
            'labels': (jnp.arange(K, dtype=jnp.int32) + b) % C,
            'masks': sem[b],
            'target_masks': tmask[b],
        })

    criterion = SegPlusCriterionPallas(
        num_classes=C,
        weight_dict={'loss_mask': 20.0, 'loss_tversky': 1.0},
        losses=['masks'],
        eos_coef=0.1, alpha=0.5, beta=0.5, mask_block=16)

    losses = criterion.forward({'pred_masks': pred_masks}, targets)
    losses = jax.tree_util.tree_map(jax.block_until_ready, losses)

    ref = _reference_losses(pred_masks, targets, alpha=0.5, beta=0.5)
    for k in ('loss_mask', 'loss_tversky'):
        got = float(losses[k])
        want = float(ref[k])
        assert np.isclose(got, want, rtol=5e-2, atol=1e-2), (k, got, want)

    print("KERNEL_OK")
</pallas_src>

<mosaic_0001>
module attributes {stable_mosaic.version = 11 : i64} {
  func.func @_focal_kernel(%arg0: i32, %arg1: i32, %arg2: i32, %arg3: memref<1x8x16x16xbf16, #tpu.memory_space<vmem>>, %arg4: memref<1x32x32xi16, #tpu.memory_space<vmem>>, %arg5: memref<32x16xbf16, #tpu.memory_space<vmem>>, %arg6: memref<16x32xbf16, #tpu.memory_space<vmem>>, %arg7: memref<1x1x1x1xf32, #tpu.memory_space<vmem>>, %arg8: memref<32x32xf32, #tpu.memory_space<vmem>>) attributes {dimension_semantics = [#tpu.dimension_semantics<parallel>, #tpu.dimension_semantics<parallel>, #tpu.dimension_semantics<arbitrary>], iteration_bounds = array<i64: 2, 1, 1>, scalar_prefetch = 0 : i64, scratch_operands = 1 : i64, tpu.core_type = #tpu.core_type<tc>, window_params = [{transform_indices = @transform_0, window_bounds = array<i64: 1, 8, 16, 16>}, {transform_indices = @transform_1, window_bounds = array<i64: 1, 32, 32>}, {transform_indices = @transform_2, window_bounds = array<i64: 32, 16>}, {pipeline_mode = #tpu.pipeline_mode<synchronous>, transform_indices = @transform_3, window_bounds = array<i64: 16, 32>}, {transform_indices = @transform_4, window_bounds = array<i64: 1, 1, 1, 1>}]} {
    %c0_i32 = arith.constant 0 : i32
    %0 = arith.cmpi eq, %arg2, %c0_i32 : i32
    %1 = arith.extui %0 : i1 to i32
    %c0_i32_0 = arith.constant 0 : i32
    %2 = arith.cmpi ne, %1, %c0_i32_0 : i32
    scf.if %2 {
      %cst_31 = arith.constant 0.000000e+00 : f32
      %81 = vector.broadcast %cst_31 : f32 to vector<32x32xf32>
      %c0_32 = arith.constant 0 : index
      %c0_33 = arith.constant 0 : index
      %82 = vector.load %arg8[%c0_32, %c0_33] : memref<32x32xf32, #tpu.memory_space<vmem>>, vector<32x32xf32>
      tpu.vector_store %arg8[%c0_32, %c0_33], %81 {strides = array<i32>} : memref<32x32xf32, #tpu.memory_space<vmem>>, vector<32x32xf32>,
    } else {
    }
    %c0 = arith.constant 0 : index
    %c0_1 = arith.constant 0 : index
    %c0_2 = arith.constant 0 : index
    %c0_3 = arith.constant 0 : index
    %3 = vector.load %arg3[%c0, %c0_1, %c0_2, %c0_3] : memref<1x8x16x16xbf16, #tpu.memory_space<vmem>>, vector<1x8x16x16xbf16>
    %4 = vector.shape_cast %3 : vector<1x8x16x16xbf16> to vector<8x16x16xbf16>
    %c0_4 = arith.constant 0 : index
    %c0_5 = arith.constant 0 : index
    %5 = vector.load %arg5[%c0_4, %c0_5] : memref<32x16xbf16, #tpu.memory_space<vmem>>, vector<32x16xbf16>
    %c0_6 = arith.constant 0 : index
    %c0_7 = arith.constant 0 : index
    %6 = vector.load %arg6[%c0_6, %c0_7] : memref<16x32xbf16, #tpu.memory_space<vmem>>, vector<16x32xbf16>
    %7 = vector.shape_cast %5 : vector<32x16xbf16> to vector<1x32x16xbf16>
    %8 = vector.shape_cast %7 : vector<1x32x16xbf16> to vector<1x32x16xbf16>
    %9 = vector.broadcast %8 : vector<1x32x16xbf16> to vector<8x32x16xbf16>
    %10 = vector.shape_cast %4 : vector<8x16x16xbf16> to vector<128x16xbf16>
    %cst = arith.constant dense<0.000000e+00> : vector<128x32xf32>
    %11 = tpu.matmul %10, %6, %cst {dimension_numbers = #tpu.dot_dimension_numbers<[1], [0], [0], [1], [0, 0, 1, 1], [], []>} : vector<128x16xbf16>, vector<16x32xbf16>, vector<128x32xf32> -> vector<128x32xf32>
    %12 = vector.shape_cast %11 : vector<128x32xf32> to vector<8x16x32xf32>
    %13 = arith.truncf %12 : vector<8x16x32xf32> to vector<8x16x32xbf16>
    "tpu.trace_start"() <{level = 10 : i32, message = "mhp,mpw->mhw"}> : () -> ()
    %cst_8 = arith.constant dense<0.000000e+00> : vector<8x32x32xf32>
    %14 = tpu.matmul %9, %13, %cst_8 {dimension_numbers = #tpu.dot_dimension_numbers<[2], [1], [1], [2], [0, 0, 0, 1, 1, 2], [0], [0]>} : vector<8x32x16xbf16>, vector<8x16x32xbf16>, vector<8x32x32xf32> -> vector<8x32x32xf32>
    "tpu.trace_stop"() : () -> ()
    %c0_9 = arith.constant 0 : index
    %c0_10 = arith.constant 0 : index
    %c0_11 = arith.constant 0 : index
    %15 = vector.load %arg4[%c0_9, %c0_10, %c0_11] : memref<1x32x32xi16, #tpu.memory_space<vmem>>, vector<1x32x32xi16>
    %16 = vector.shape_cast %15 : vector<1x32x32xi16> to vector<32x32xi16>
    %17 = arith.extsi %16 : vector<32x32xi16> to vector<32x32xi32>
    %c8_i32 = arith.constant 8 : i32
    %18 = arith.muli %arg1, %c8_i32 : i32
    %19 = tpu.iota {dimensions = array<i32: 0>} : vector<8x1xi32>
    %20 = vector.broadcast %18 : i32 to vector<8x1xi32>
    %21 = arith.addi %20, %19 : vector<8x1xi32>
    %22 = vector.shape_cast %21 : vector<8x1xi32> to vector<8x1x1xi32>
    %23 = vector.shape_cast %17 : vector<32x32xi32> to vector<1x32x32xi32>
    %24 = vector.broadcast %23 : vector<1x32x32xi32> to vector<8x32x32xi32>
    %25 = vector.broadcast %22 : vector<8x1x1xi32> to vector<8x32x32xi32>
    %26 = arith.cmpi eq, %24, %25 : vector<8x32x32xi32>
    %c255_i32 = arith.constant 255 : i32
    %27 = vector.broadcast %c255_i32 : i32 to vector<1x32x32xi32>
    %28 = arith.cmpi ne, %23, %27 : vector<1x32x32xi32>
    %29 = vector.broadcast %28 : vector<1x32x32xi1> to vector<8x32x32xi1>
    %30 = arith.andi %26, %29 : vector<8x32x32xi1>
    %cst_12 = arith.constant 1.000000e+00 : f32
    %cst_13 = arith.constant 0.000000e+00 : f32
    %31 = vector.broadcast %cst_12 : f32 to vector<8x32x32xf32>
    %32 = vector.broadcast %cst_13 : f32 to vector<8x32x32xf32>
    %33 = arith.select %30, %31, %32 : vector<8x32x32xi1>, vector<8x32x32xf32>
    %34 = math.absf %14 : vector<8x32x32xf32>
    %cst_14 = arith.constant 0.000000e+00 : f32
    %35 = vector.broadcast %cst_14 : f32 to vector<8x32x32xf32>
    %36 = arith.subf %35, %34 : vector<8x32x32xf32>
    %37 = math.exp %36 : vector<8x32x32xf32>
    %cst_15 = arith.constant 1.000000e+00 : f32
    %38 = vector.broadcast %cst_15 : f32 to vector<8x32x32xf32>
    %39 = arith.addf %38, %37 : vector<8x32x32xf32>
    %40 = tpu.reciprocal %39 {approx = true} : vector<8x32x32xf32> -> vector<8x32x32xf32>
    %cst_16 = arith.constant 0.000000e+00 : f32
    %41 = vector.broadcast %cst_16 : f32 to vector<8x32x32xf32>
    %42 = arith.cmpf oge, %14, %41 : vector<8x32x32xf32>
    %43 = arith.mulf %37, %40 : vector<8x32x32xf32>
    %44 = arith.select %42, %40, %43 : vector<8x32x32xi1>, vector<8x32x32xf32>
    %cst_17 = arith.constant 0.000000e+00 : f32
    %45 = vector.broadcast %cst_17 : f32 to vector<8x32x32xf32>
    %46 = arith.maximumf %14, %45 : vector<8x32x32xf32>
    %47 = arith.mulf %14, %33 : vector<8x32x32xf32>
    %48 = arith.subf %46, %47 : vector<8x32x32xf32>
    %cst_18 = arith.constant 1.000000e+00 : f32
    %49 = vector.broadcast %cst_18 : f32 to vector<8x32x32xf32>
    %50 = arith.addf %49, %37 : vector<8x32x32xf32>
    %51 = math.log %50 : vector<8x32x32xf32>
    %52 = arith.addf %48, %51 : vector<8x32x32xf32>
    %53 = arith.mulf %44, %33 : vector<8x32x32xf32>
    %cst_19 = arith.constant 1.000000e+00 : f32
    %54 = vector.broadcast %cst_19 : f32 to vector<8x32x32xf32>
    %55 = arith.subf %54, %44 : vector<8x32x32xf32>
    %cst_20 = arith.constant 1.000000e+00 : f32
    %56 = vector.broadcast %cst_20 : f32 to vector<8x32x32xf32>
    %57 = arith.subf %56, %33 : vector<8x32x32xf32>
    %58 = arith.mulf %55, %57 : vector<8x32x32xf32>
    %59 = arith.addf %53, %58 : vector<8x32x32xf32>
    %cst_21 = arith.constant 1.000000e+00 : f32
    %60 = vector.broadcast %cst_21 : f32 to vector<8x32x32xf32>
    %61 = arith.subf %60, %59 : vector<8x32x32xf32>
    %cst_22 = arith.constant 2.500000e-01 : f32
    %62 = vector.broadcast %cst_22 : f32 to vector<8x32x32xf32>
    %63 = arith.mulf %62, %33 : vector<8x32x32xf32>
    %cst_23 = arith.constant 1.000000e+00 : f32
    %64 = vector.broadcast %cst_23 : f32 to vector<8x32x32xf32>
    %65 = arith.subf %64, %33 : vector<8x32x32xf32>
    %cst_24 = arith.constant 7.500000e-01 : f32
    %66 = vector.broadcast %cst_24 : f32 to vector<8x32x32xf32>
    %67 = arith.mulf %66, %65 : vector<8x32x32xf32>
    %68 = arith.addf %63, %67 : vector<8x32x32xf32>
    %69 = arith.mulf %68, %52 : vector<8x32x32xf32>
    %70 = arith.mulf %69, %61 : vector<8x32x32xf32>
    %71 = arith.mulf %70, %61 : vector<8x32x32xf32>
    %c0_i32_25 = arith.constant 0 : i32
    %72 = arith.cmpi ne, %arg1, %c0_i32_25 : i32
    %73 = arith.extui %72 : i1 to i32
    %c0_i32_26 = arith.constant 0 : i32
    %74 = arith.cmpi ne, %73, %c0_i32_26 : i32
    scf.if %74 {
      %c0_31 = arith.constant 0 : index
      %c0_32 = arith.constant 0 : index
      %81 = vector.load %arg8[%c0_31, %c0_32] : memref<32x32xf32, #tpu.memory_space<vmem>>, vector<32x32xf32>
      %cst_33 = arith.constant dense<0.000000e+00> : vector<32x32xf32>
      %82 = vector.multi_reduction <add>, %71, %cst_33 [0] : vector<8x32x32xf32> to vector<32x32xf32>
      %83 = arith.addf %81, %82 : vector<32x32xf32>
      %c0_34 = arith.constant 0 : index
      %c0_35 = arith.constant 0 : index
      %84 = vector.load %arg8[%c0_34, %c0_35] : memref<32x32xf32, #tpu.memory_space<vmem>>, vector<32x32xf32>
      tpu.vector_store %arg8[%c0_34, %c0_35], %83 {strides = array<i32>} : memref<32x32xf32, #tpu.memory_space<vmem>>, vector<32x32xf32>,
    } else {
    }
    %c0_i32_27 = arith.constant 0 : i32
    %75 = arith.cmpi eq, %arg1, %c0_i32_27 : i32
    %76 = arith.extui %75 : i1 to i32
    %c0_i32_28 = arith.constant 0 : i32
    %77 = arith.cmpi ne, %76, %c0_i32_28 : i32
    scf.if %77 {
      %c0_31 = arith.constant 0 : index
      %c0_32 = arith.constant 0 : index
      %81 = vector.load %arg8[%c0_31, %c0_32] : memref<32x32xf32, #tpu.memory_space<vmem>>, vector<32x32xf32>
      %c4_i32 = arith.constant 4 : i32
      %82 = vector.broadcast %c4_i32 : i32 to vector<8x1x1xi32>
      %83 = arith.cmpi slt, %22, %82 : vector<8x1x1xi32>
      %cst_33 = arith.constant 0.000000e+00 : f32
      %84 = vector.shape_cast %83 : vector<8x1x1xi1> to vector<8x1x1xi1>
      %85 = vector.broadcast %84 : vector<8x1x1xi1> to vector<8x32x32xi1>
      %86 = vector.broadcast %cst_33 : f32 to vector<8x32x32xf32>
      %87 = arith.select %85, %71, %86 : vector<8x32x32xi1>, vector<8x32x32xf32>
      %cst_34 = arith.constant dense<0.000000e+00> : vector<32x32xf32>
      %88 = vector.multi_reduction <add>, %87, %cst_34 [0] : vector<8x32x32xf32> to vector<32x32xf32>
      %89 = arith.addf %81, %88 : vector<32x32xf32>
      %c0_35 = arith.constant 0 : index
      %c0_36 = arith.constant 0 : index
      %90 = vector.load %arg8[%c0_35, %c0_36] : memref<32x32xf32, #tpu.memory_space<vmem>>, vector<32x32xf32>
      tpu.vector_store %arg8[%c0_35, %c0_36], %89 {strides = array<i32>} : memref<32x32xf32, #tpu.memory_space<vmem>>, vector<32x32xf32>,
    } else {
    }
    %c0_i32_29 = arith.constant 0 : i32
    %78 = arith.cmpi eq, %arg2, %c0_i32_29 : i32
    %79 = arith.extui %78 : i1 to i32
    %c0_i32_30 = arith.constant 0 : i32
    %80 = arith.cmpi ne, %79, %c0_i32_30 : i32
    scf.if %80 {
      %c0_31 = arith.constant 0 : index
      %c0_32 = arith.constant 0 : index
      %81 = vector.load %arg8[%c0_31, %c0_32] : memref<32x32xf32, #tpu.memory_space<vmem>>, vector<32x32xf32>
      %82 = vector.shape_cast %81 : vector<32x32xf32> to vector<1x32x32xf32>
      %cst_33 = arith.constant dense<0.000000e+00> : vector<1xf32>
      %83 = vector.multi_reduction <add>, %82, %cst_33 [1, 2] : vector<1x32x32xf32> to vector<1xf32>
      %84 = vector.shape_cast %83 : vector<1xf32> to vector<1x1x1xf32>
      %85 = vector.extract %84[0, 0, 0] : f32 from vector<1x1x1xf32>
      %cst_34 = arith.constant 9.765625E-4 : f32
      %86 = arith.mulf %85, %cst_34 : f32
      %87 = vector.broadcast %86 : f32 to vector<1x1x1x1xf32>
      %c0_35 = arith.constant 0 : index
      %c0_36 = arith.constant 0 : index
      %c0_37 = arith.constant 0 : index
      %c0_38 = arith.constant 0 : index
      %88 = vector.load %arg7[%c0_35, %c0_36, %c0_37, %c0_38] : memref<1x1x1x1xf32, #tpu.memory_space<vmem>>, vector<1x1x1x1xf32>
      tpu.vector_store %arg7[%c0_35, %c0_36, %c0_37, %c0_38], %87 {strides = array<i32>} : memref<1x1x1x1xf32, #tpu.memory_space<vmem>>, vector<1x1x1x1xf32>,
    } else {
    }
    return
  }
  func.func @transform_0(%arg0: i32, %arg1: i32, %arg2: i32) -> (i32, i32, i32, i32) {
    %c0_i32 = arith.constant 0 : i32
    %c0_i32_0 = arith.constant 0 : i32
    %c0_i32_1 = arith.constant 0 : i32
    return %arg0, %arg1, %c0_i32, %c0_i32_0 : i32, i32, i32, i32
  }
  func.func @transform_1(%arg0: i32, %arg1: i32, %arg2: i32) -> (i32, i32, i32) {
    %c0_i32 = arith.constant 0 : i32
    %c0_i32_0 = arith.constant 0 : i32
    return %arg0, %arg2, %c0_i32 : i32, i32, i32
  }
  func.func @transform_2(%arg0: i32, %arg1: i32, %arg2: i32) -> (i32, i32) {
    %c0_i32 = arith.constant 0 : i32
    %c0_i32_0 = arith.constant 0 : i32
    return %arg2, %c0_i32 : i32, i32
  }
  func.func @transform_3(%arg0: i32, %arg1: i32, %arg2: i32) -> (i32, i32) {
    %c0_i32 = arith.constant 0 : i32
    %c0_i32_0 = arith.constant 0 : i32
    %c0_i32_1 = arith.constant 0 : i32
    return %c0_i32, %c0_i32_0 : i32, i32
  }
  func.func @transform_4(%arg0: i32, %arg1: i32, %arg2: i32) -> (i32, i32, i32, i32) {
    %c0_i32 = arith.constant 0 : i32
    %c0_i32_0 = arith.constant 0 : i32
    %c0_i32_1 = arith.constant 0 : i32
    return %arg0, %arg1, %c0_i32, %c0_i32_0 : i32, i32, i32, i32
  }
}

</mosaic_0001>

<llo_original>
// kernel: tpu_custom_call.1
$region0: #{tpu_custom_call.1}
  #allocation0 [shape = 'u32[]', space=smem, size = 0x4, offset = 0x4, fixed_abs, tag = 'smem constant byte address 0x4 - core index']
  #allocation1 [shape = 'u32[144,128]{1,0:T(1,128)}', space=vmem, size = 0x12000, scoped, tag = 'internal scratch']
  #allocation2 [shape = 'f32[32,32]{1,0:T(8,128)}', space=vmem, size = 0x4000, scoped, tag = 'scratch operand']
  %s0 = inlined_call_operand.hbm [shape: bf16[2,8,16,16], index: 0, kind: input, shape index: {}]
  %s1 = inlined_call_operand.hbm [shape: s16[2,32,32], index: 1, kind: input, shape index: {}]
  %s2 = inlined_call_operand.vmem [shape: bf16[32,16], index: 2, kind: input, shape index: {}]
  %s3 = inlined_call_operand.vmem [shape: bf16[16,32], index: 3, kind: input, shape index: {}]
  %s4 = inlined_call_operand.vmem [shape: f32[2,1,1,1], index: 4, kind: output, shape index: {}]
  %s5 = sld [smem:[#allocation0]]
  $region73: #{tpu_custom_call.1} parent=0
    _
  %s7 = ssub.s32 1, %s5
  %s8 = scalar_select 0, %s7, %s5
  $region1: #{tpu_custom_call.1} parent=0
    #allocation3 [shape = 'u8[65536]{0}', space=vmem, size = 0x10000, scoped, tag = 'input window, operand 0']
    #allocation4 [shape = 's32[2]{0}', space=sflag, size = 0x8, scoped, tag = 'scoped memory for tpu_custom_call.1']
    #allocation5 [shape = 'u8[16384]{0}', space=vmem, size = 0x4000, scoped, tag = 'input window, operand 1']
    #allocation6 [shape = 's32[2]{0}', space=sflag, size = 0x8, scoped, tag = 'scoped memory for tpu_custom_call.1']
    %9 = vsyncpa [#allocation4], 0
    %s10 = scalar_lea.sflag [#allocation4], 1
    %11 = vsyncpa %s10, 0
    %12 = vsyncpa [#allocation6], 0
    %s13 = scalar_lea.sflag [#allocation6], 1
    %14 = vsyncpa %s13, 0
    loop: start=0, step=1, limit=4
    $region2: #{tpu_custom_call.1} parent=1 // loop_pre_header
      _
    $region3: #{tpu_custom_call.1} parent=1 // loop_header
      %s16 = sphi 0, %s20
      %p17 = scmp.ge.s32.totalorder %s16, 4
      %s23 = sphi 0, %s42
      %s24 = sphi 0, %s38
      %s25 = sphi 0, %s34
      %s26 = sphi 0, %s23
      %s27 = sphi 0, %s24
      %s28 = sphi 0, %s25
      %s29 = sphi 0, %s26
      %s30 = sphi 0, %s27
      %s31 = sphi 0, %s28
      %s47 = sphi 0, %s49
      %s50 = sphi 0, %s47
      %s51 = sphi 0, %s50
      %s67 = sphi 0, %s51
      %s75 = sphi 0, %s77
      %s78 = sphi 0, %s75
      %s79 = sphi 0, %s78
      %s95 = sphi 0, %s79
      %s101 = sphi 0, %s103
      %s104 = sphi 0, %s101
      %s105 = sphi 0, %s104
      %s121 = sphi 0, %s105
      %s125 = sphi 0, %s125
      %s127 = sphi 0, %s125
      %s128 = sphi 0, %s127
      %s142 = sphi 0, %s128
      %s150 = sphi 0, %s152
      %s153 = sphi 0, %s150
      %s154 = sphi 0, %s153
      %s170 = sphi 0, %s154
    $region4: #{tpu_custom_call.1} parent=1 // loop_header_branch
      %19 = sbr.rel (%p17) target = $region8
    $region5: #{tpu_custom_call.1} parent=1 // loop_body
      %s21 = ssub.s32 %s16, 1
      %s22 = ssub.s32 %s16, 2
      %s32 = sadd.s32 1, %s25
      %p33 = scmp.ge.s32.totalorder %s32, 1
      %s34 = scalar_select %p33, 0, %s32
      %s35 = sadd.s32 1, %s24
      %s36 = scalar_select %p33, %s35, %s24
      %p37 = scmp.ge.s32.totalorder %s36, 1
      %s38 = scalar_select %p37, 0, %s36
      %s39 = sadd.s32 1, %s23
      %s40 = scalar_select %p37, %s39, %s23
      %p41 = scmp.ge.s32.totalorder %s40, 2
      %s42 = scalar_select %p41, 0, %s40
      %s43 = ssub.s32 %s23, %s42
      %s44 = ssub.s32 %s24, %s38
      %s45 = sor.u32 %s43, %s44
      %p46 = scmp.eq.s32.totalorder %s45, 0
      %s48 = sadd.s32 %s47, 1
      %s49 = scalar_select %p46, %s47, %s48
      %p52 = pneg %p46
      %p53 = scmp.eq.s32.totalorder %s16, 1
      %p54 = por %p52, %p53
      %p55 = scmp.ne.s32.totalorder %s47, %s50
      %p56 = scmp.eq.s32.totalorder %s16, 0
      %p57 = por %p55, %p56
      %p58 = scmp.ne.s32.totalorder %s47, %s50
      %p59 = scmp.eq.s32.totalorder %s21, 1
      %p60 = por %p58, %p59
      %p61 = scmp.ne.s32.totalorder %s50, %s51
      %p62 = scmp.eq.s32.totalorder %s21, 0
      %p63 = por %p61, %p62
      %p64 = scmp.ne.s32.totalorder %s50, %s51
      %p65 = scmp.eq.s32.totalorder %s22, 1
      %p66 = por %p64, %p65
      %p68 = scmp.ne.s32.totalorder %s51, %s67
      %p69 = scmp.eq.s32.totalorder %s22, 0
      %p70 = por %p68, %p69
      %s71 = ssub.s32 %s23, %s42
      %s72 = ssub.s32 %s25, %s34
      %s73 = sor.u32 %s71, %s72
      %p74 = scmp.eq.s32.totalorder %s73, 0
      %s76 = sadd.s32 %s75, 1
      %s77 = scalar_select %p74, %s75, %s76
      %p80 = pneg %p74
      %p81 = scmp.eq.s32.totalorder %s16, 1
      %p82 = por %p80, %p81
      %p83 = scmp.ne.s32.totalorder %s75, %s78
      %p84 = scmp.eq.s32.totalorder %s16, 0
      %p85 = por %p83, %p84
      %p86 = scmp.ne.s32.totalorder %s75, %s78
      %p87 = scmp.eq.s32.totalorder %s21, 1
      %p88 = por %p86, %p87
      %p89 = scmp.ne.s32.totalorder %s78, %s79
      %p90 = scmp.eq.s32.totalorder %s21, 0
      %p91 = por %p89, %p90
      %p92 = scmp.ne.s32.totalorder %s78, %s79
      %p93 = scmp.eq.s32.totalorder %s22, 1
      %p94 = por %p92, %p93
      %p96 = scmp.ne.s32.totalorder %s79, %s95
      %p97 = scmp.eq.s32.totalorder %s22, 0
      %p98 = por %p96, %p97
      %s99 = ssub.s32 %s25, %s34
      %p100 = scmp.eq.s32.totalorder %s99, 0
      %s102 = sadd.s32 %s101, 1
      %s103 = scalar_select %p100, %s101, %s102
      %p106 = pneg %p100
      %p107 = scmp.eq.s32.totalorder %s16, 1
      %p108 = por %p106, %p107
      %p109 = scmp.ne.s32.totalorder %s101, %s104
      %p110 = scmp.eq.s32.totalorder %s16, 0
      %p111 = por %p109, %p110
      %p112 = scmp.ne.s32.totalorder %s101, %s104
      %p113 = scmp.eq.s32.totalorder %s21, 1
      %p114 = por %p112, %p113
      %p115 = scmp.ne.s32.totalorder %s104, %s105
      %p116 = scmp.eq.s32.totalorder %s21, 0
      %p117 = por %p115, %p116
      %p118 = scmp.ne.s32.totalorder %s104, %s105
      %p119 = scmp.eq.s32.totalorder %s22, 1
      %p120 = por %p118, %p119
      %p122 = scmp.ne.s32.totalorder %s105, %s121
      %p123 = scmp.eq.s32.totalorder %s22, 0
      %p124 = por %p122, %p123
      %s126 = sadd.s32 %s125, 1
      %p129 = scmp.eq.s32.totalorder %s16, 1
      %p130 = scmp.ne.s32.totalorder %s125, %s127
      %p131 = scmp.eq.s32.totalorder %s16, 0
      %p132 = por %p130, %p131
      %p133 = scmp.ne.s32.totalorder %s125, %s127
      %p134 = scmp.eq.s32.totalorder %s21, 1
      %p135 = por %p133, %p134
      %p136 = scmp.ne.s32.totalorder %s127, %s128
      %p137 = scmp.eq.s32.totalorder %s21, 0
      %p138 = por %p136, %p137
      %p139 = scmp.ne.s32.totalorder %s127, %s128
      %p140 = scmp.eq.s32.totalorder %s22, 1
      %p141 = por %p139, %p140
      %p143 = scmp.ne.s32.totalorder %s128, %s142
      %p144 = scmp.eq.s32.totalorder %s22, 0
      %p145 = por %p143, %p144
      %s146 = ssub.s32 %s23, %s42
      %s147 = ssub.s32 %s24, %s38
      %s148 = sor.u32 %s146, %s147
      %p149 = scmp.eq.s32.totalorder %s148, 0
      %s151 = sadd.s32 %s150, 1
      %s152 = scalar_select %p149, %s150, %s151
      %p155 = pneg %p149
      %p156 = scmp.eq.s32.totalorder %s16, 1
      %p157 = por %p155, %p156
      %p158 = scmp.ne.s32.totalorder %s150, %s153
      %p159 = scmp.eq.s32.totalorder %s16, 0
      %p160 = por %p158, %p159
      %p161 = scmp.ne.s32.totalorder %s150, %s153
      %p162 = scmp.eq.s32.totalorder %s21, 1
      %p163 = por %p161, %p162
      %p164 = scmp.ne.s32.totalorder %s153, %s154
      %p165 = scmp.eq.s32.totalorder %s21, 0
      %p166 = por %p164, %p165
      %p167 = scmp.ne.s32.totalorder %s153, %s154
      %p168 = scmp.eq.s32.totalorder %s22, 1
      %p169 = por %p167, %p168
      %p171 = scmp.ne.s32.totalorder %s154, %s170
      %p172 = scmp.eq.s32.totalorder %s22, 0
      %p173 = por %p171, %p172
      %p174 = scmp.le.s32.totalorder 1, %s16
      %p175 = scmp.lt.s32.totalorder %s16, 3
      %p176 = pnand %p174, %p175
      %p177 = pneg %p176
      // Predicated region
      $region9: #{tpu_custom_call.1} parent=5 // pred_check
        _
      $region10: #{tpu_custom_call.1} parent=5 // pred_check_branch
        %179 = sbr.rel (%p176) target = $region12
      $region11: #{tpu_custom_call.1} parent=5 // pred_region
        %s180 = ssub.s32 %s16, 1
        // Predicated region
        $region13: #{tpu_custom_call.1} parent=11 // pred_check
          %p181 = pneg %p117
        $region14: #{tpu_custom_call.1} parent=11 // pred_check_branch
          %183 = sbr.rel (%p181) target = $region16
        $region15: #{tpu_custom_call.1} parent=11 // pred_region
          %s184 = smul.u32 4, %s28
          %p185 = scmp.lt.s32.totalorder %s184, 3
          %s186 = scalar_select %p185, %s184, 3
          %s187 = smul.addr %s186, 4
          %s188 = scalar_lea.vmem %s2, %s187
          %s189 = smul.u32 4, %s28
        $region16: #{tpu_custom_call.1} parent=11 // pred_fallthru
          _
        // Predicated region
        $region17: #{tpu_custom_call.1} parent=11 // pred_check
          %p190 = pneg %p138
        $region18: #{tpu_custom_call.1} parent=11 // pred_check_branch
          %192 = sbr.rel (%p190) target = $region20
        $region19: #{tpu_custom_call.1} parent=11 // pred_region
          _
        $region20: #{tpu_custom_call.1} parent=11 // pred_fallthru
          _
      $region12: #{tpu_custom_call.1} parent=5 // pred_fallthru
        _
      %p193 = scmp.lt.s32.totalorder %s16, 2
      // Predicated region
      $region21: #{tpu_custom_call.1} parent=5 // pred_check
        %p194 = pneg %p193
      $region22: #{tpu_custom_call.1} parent=5 // pred_check_branch
        %196 = sbr.rel (%p194) target = $region24
      $region23: #{tpu_custom_call.1} parent=5 // pred_region
        // Predicated region
        $region25: #{tpu_custom_call.1} parent=23 // pred_check
          %p197 = pneg %p57
        $region26: #{tpu_custom_call.1} parent=23 // pred_check_branch
          %199 = sbr.rel (%p197) target = $region28
        $region27: #{tpu_custom_call.1} parent=23 // pred_region
          %s200 = sand.u32 %s47, 1
          %s201 = scalar_lea.sflag [#allocation4], %s200
          %s202 = sand.u32 %s47, 1
          %s203 = smul.addr %s202, 64
          %s204 = scalar_lea.vmem [#allocation3], %s203
          %s205 = smul.u32 8, %s24
          %s207 = ssub.s32 1024, 1024
          %208 = vsyncadd %s201, %s207
          %s209 = smul.addr %s205, 2
          %s210 = smul.addr %s23, 16
          %s211 = sadd.s32 %s209, %s210
          %s212 = smul.addr %s211, 64
          %s213 = scalar_lea.hbm %s0, %s212
          %s214 = sshll.u32 %s204, 4
          %s215 = int_to_ptr.vmem [resolvable:$true] %s214
          %220 = dma.hbm_to_vmem [thread:$0]  %s213, 1024, %s215, %s201, 64, 64, 4
        $region28: #{tpu_custom_call.1} parent=23 // pred_fallthru
          _
        // Predicated region
        $region29: #{tpu_custom_call.1} parent=23 // pred_check
          %p221 = pneg %p85
        $region30: #{tpu_custom_call.1} parent=23 // pred_check_branch
          %223 = sbr.rel (%p221) target = $region32
        $region31: #{tpu_custom_call.1} parent=23 // pred_region
          %s224 = sand.u32 %s75, 1
          %s225 = scalar_lea.sflag [#allocation6], %s224
          %s226 = sand.u32 %s75, 1
          %s227 = smul.addr %s226, 16
          %s228 = scalar_lea.vmem [#allocation5], %s227
          %s229 = smul.u32 4, %s25
          %s231 = ssub.s32 256, 256
          %232 = vsyncadd %s225, %s231
          %s233 = smul.addr %s23, 4
          %s234 = sadd.s32 %s229, %s233
          %s235 = smul.addr %s234, 64
          %s236 = scalar_lea.hbm %s1, %s235
          %s237 = sshll.u32 %s228, 4
          %s238 = int_to_ptr.vmem [resolvable:$true] %s237
          %243 = dma.hbm_to_vmem [thread:$0]  %s236, 256, %s238, %s225, 64, 64, 4
        $region32: #{tpu_custom_call.1} parent=23 // pred_fallthru
          _
      $region24: #{tpu_custom_call.1} parent=5 // pred_fallthru
        _
      %p244 = scmp.le.s32.totalorder 1, %s16
      %p245 = scmp.lt.s32.totalorder %s16, 3
      %p246 = pnand %p244, %p245
      %p247 = pneg %p246
      // Predicated region
      $region33: #{tpu_custom_call.1} parent=5 // pred_check
        _
      $region34: #{tpu_custom_call.1} parent=5 // pred_check_branch
        %249 = sbr.rel (%p246) target = $region36
      $region35: #{tpu_custom_call.1} parent=5 // pred_region
        %s250 = ssub.s32 %s16, 1
        %s251 = sand.u32 %s50, 1
        %s252 = scalar_lea.sflag [#allocation4], %s251
        %s253 = sand.u32 %s50, 1
        %s254 = smul.addr %s253, 64
        %s255 = scalar_lea.vmem [#allocation3], %s254
        // Predicated region
        $region37: #{tpu_custom_call.1} parent=35 // pred_check
          %p256 = pneg %p63
        $region38: #{tpu_custom_call.1} parent=35 // pred_check_branch
          %258 = sbr.rel (%p256) target = $region40
        $region39: #{tpu_custom_call.1} parent=35 // pred_region
          %259 = dma.done %s252, 1024
        $region40: #{tpu_custom_call.1} parent=35 // pred_fallthru
          _
        %s260 = sand.u32 %s78, 1
        %s261 = scalar_lea.sflag [#allocation6], %s260
        %s262 = sand.u32 %s78, 1
        %s263 = smul.addr %s262, 16
        %s264 = scalar_lea.vmem [#allocation5], %s263
        // Predicated region
        $region41: #{tpu_custom_call.1} parent=35 // pred_check
          %p265 = pneg %p91
        $region42: #{tpu_custom_call.1} parent=35 // pred_check_branch
          %267 = sbr.rel (%p265) target = $region44
        $region43: #{tpu_custom_call.1} parent=35 // pred_region
          %268 = dma.done %s261, 256
        $region44: #{tpu_custom_call.1} parent=35 // pred_fallthru
          _
        %s269 = sand.u32 %s50, 1
        %s270 = scalar_lea.sflag [#allocation4], %s269
        %s271 = sand.u32 %s50, 1
        %s272 = smul.addr %s271, 64
        %s273 = scalar_lea.vmem [#allocation3], %s272
        %p274 = pneg %p63
        %p275 = pneg %p60
        %s276 = sand.u32 %s78, 1
        %s277 = scalar_lea.sflag [#allocation6], %s276
        %s278 = sand.u32 %s78, 1
        %s279 = smul.addr %s278, 16
        %s280 = scalar_lea.vmem [#allocation5], %s279
        %p281 = pneg %p91
        %p282 = pneg %p88
        %s283 = smul.u32 4, %s28
        %p284 = scmp.lt.s32.totalorder %s283, 3
        %s285 = scalar_select %p284, %s283, 3
        %s286 = smul.addr %s285, 4
        %s287 = scalar_lea.vmem %s2, %s286
        %p288 = pneg %p117
        %p289 = pneg %p114
        %p290 = pneg %p138
        %p291 = pneg %p135
        %p292 = pneg %p166
        %p293 = pneg %p163
        %p294 = scmp.lt.s32.totalorder %s26, 1
        %s295 = scalar_select %p294, %s26, 1
        %p296 = scmp.lt.s32.totalorder %s27, 0
        %s297 = scalar_select %p296, %s27, 0
        %s298 = sadd.s32 %s297, %s295
        %s299 = scalar_lea.vmem %s4, %s298
        %s300 = smul.u32 8, %s27
        %s301 = smul.u32 4, %s28
        %s302 = smul.u32 4, %s28
        %p303 = scmp.lt.s32.totalorder %s302, 3
        %s304 = scalar_select %p303, %s302, 3
        %s305 = smul.addr %s304, 4
        %s306 = scalar_lea.vmem %s2, %s305
        %s307 = smul.u32 4, %s28
        %p308 = scmp.lt.s32.totalorder %s26, 1
        %s309 = scalar_select %p308, %s26, 1
        %p310 = scmp.lt.s32.totalorder %s27, 0
        %s311 = scalar_select %p310, %s27, 0
        %s312 = sadd.s32 %s311, %s309
        %s313 = scalar_lea.vmem %s4, %s312
        %p315 = scmp.eq.s32.totalorder %s28, 0
        // Predicated region
        $region45: #{tpu_custom_call.1} parent=35 // pred_check
          %p316 = pneg %p315
        $region46: #{tpu_custom_call.1} parent=35 // pred_check_branch
          %318 = sbr.rel (%p316) target = $region48
        $region47: #{tpu_custom_call.1} parent=35 // pred_region
          %vm319 = vcmask 261120
          %320 = vst.msk [vmem:[#allocation2] sm:$0xff] %vm319, 0.0
          %321 = vst.msk [vmem:[#allocation2 + $0x8] sm:$0xff] %vm319, 0.0
          %322 = vst.msk [vmem:[#allocation2 + $0x10] sm:$0xff] %vm319, 0.0
          %323 = vst.msk [vmem:[#allocation2 + $0x18] sm:$0xff] %vm319, 0.0
        $region48: #{tpu_custom_call.1} parent=35 // pred_fallthru
          _
        %v324 = vld [vmem:[%s255] sm:$0xf]
        %v325 = vld [vmem:[%s255 + $0x4] sm:$0xf]
        %v326 = vld [vmem:[%s255 + $0x8] sm:$0xf]
        %v327 = vld [vmem:[%s255 + $0xc] sm:$0xf]
        %v328 = vld [vmem:[%s255 + $0x10] sm:$0xf]
        %v329 = vld [vmem:[%s255 + $0x14] sm:$0xf]
        %v330 = vld [vmem:[%s255 + $0x18] sm:$0xf]
        %v331 = vld [vmem:[%s255 + $0x1c] sm:$0xf]
        %v332 = vld [vmem:[%s255 + $0x20] sm:$0xf]
        %v333 = vld [vmem:[%s255 + $0x24] sm:$0xf]
        %v334 = vld [vmem:[%s255 + $0x28] sm:$0xf]
        %v335 = vld [vmem:[%s255 + $0x2c] sm:$0xf]
        %v336 = vld [vmem:[%s255 + $0x30] sm:$0xf]
        %v337 = vld [vmem:[%s255 + $0x34] sm:$0xf]
        %v338 = vld [vmem:[%s255 + $0x38] sm:$0xf]
        %v339 = vld [vmem:[%s255 + $0x3c] sm:$0xf]
        %v340 = vld [vmem:[%s306] sm:$0xf]
        %v341 = vld [vmem:[%s306 + $0x4] sm:$0xf]
        %v342 = vld [vmem:[%s306 + $0x8] sm:$0xf]
        %v343 = vld [vmem:[%s306 + $0xc] sm:$0xf]
        %v344 = vld [vmem:[%s3] sm:$0xf]
        %v345 = vld [vmem:[%s3 + $0x4] sm:$0xf]
        %v362 = vunpack.c.l.b16 %v324
        %v363 = vunpack.c.l.b16 %v325
        %v364 = vunpack.c.l.b16 %v326
        %v365 = vunpack.c.l.b16 %v327
        %v366 = vunpack.c.l.b16 %v328
        %v367 = vunpack.c.l.b16 %v329
        %v368 = vunpack.c.l.b16 %v330
        %v369 = vunpack.c.l.b16 %v331
        %v370 = vunpack.c.l.b16 %v332
        %v371 = vunpack.c.l.b16 %v333
        %v372 = vunpack.c.l.b16 %v334
        %v373 = vunpack.c.l.b16 %v335
        %v374 = vunpack.c.l.b16 %v336
        %v375 = vunpack.c.l.b16 %v337
        %v376 = vunpack.c.l.b16 %v338
        %v377 = vunpack.c.l.b16 %v339
        %v378 = vpack.c.b16 %v363, %v362
        %v379 = vpack.c.b16 %v365, %v364
        %v380 = vpack.c.b16 %v367, %v366
        %v381 = vpack.c.b16 %v369, %v368
        %v382 = vpack.c.b16 %v371, %v370
        %v383 = vpack.c.b16 %v373, %v372
        %v384 = vpack.c.b16 %v375, %v374
        %v385 = vpack.c.b16 %v377, %v376
        %v388 = vunpack.c.l.b16 %v344
        %v389 = vunpack.c.l.b16 %v345
        %v390 = vpack.c.b16 %v389, %v388
        %vm392 = vcmask 130048
        %v394 = vsel %vm392, %v378, 0
        %v397 = vsel %vm392, %v379, 0
        %v400 = vsel %vm392, %v380, 0
        %v403 = vsel %vm392, %v381, 0
        %v406 = vsel %vm392, %v382, 0
        %v409 = vsel %vm392, %v383, 0
        %v412 = vsel %vm392, %v384, 0
        %v415 = vsel %vm392, %v385, 0
        %417 = vmatprep.subr.bf16.mxu0 0
        %418 = vmatpush1.bf16.msra.mxu0 %v390
        %419 = vmatprep.subr.bf16.mxu0 0
        %420 = vmatpush1.bf16.msra.mxu0 0
        %421 = vmatprep.subr.bf16.mxu0 0
        %422 = vmatpush1.bf16.msra.mxu0 0
        %423 = vmatprep.subr.bf16.mxu0 0
        %424 = vmatpush1.bf16.msra.mxu0 0
        %425 = vmatprep.subr.bf16.mxu0 0
        %426 = vmatpush1.bf16.msra.mxu0 0
        %427 = vmatprep.subr.bf16.mxu0 0
        %428 = vmatpush1.bf16.msra.mxu0 0
        %429 = vmatprep.subr.bf16.mxu0 0
        %430 = vmatpush1.bf16.msra.mxu0 0
        %431 = vmatprep.subr.bf16.mxu0 0
        %432 = vmatpush1.bf16.msra.mxu0 0
        %433 = vmatprep.subr.bf16.mxu0 0
        %434 = vmatpush1.bf16.msra.mxu0 0
        %435 = vmatprep.subr.bf16.mxu0 0
        %436 = vmatpush1.bf16.msra.mxu0 0
        %437 = vmatprep.subr.bf16.mxu0 0
        %438 = vmatpush1.bf16.msra.mxu0 0
        %439 = vmatprep.subr.bf16.mxu0 0
        %440 = vmatpush1.bf16.msra.mxu0 0
        %441 = vmatprep.subr.bf16.mxu0 0
        %442 = vmatpush1.bf16.msra.mxu0 0
        %443 = vmatprep.subr.bf16.mxu0 0
        %444 = vmatpush1.bf16.msra.mxu0 0
        %445 = vmatprep.subr.bf16.mxu0 0
        %446 = vmatpush1.bf16.msra.mxu0 0
        %447 = vmatprep.subr.bf16.mxu0 0
        %448 = vmatpush1.bf16.msra.mxu0 0
        %449 = vmatprep.mubr.bf16.mxu0 0
        %450 = vmatmul.mubr.bf16.gmra.mrb[0].mxu0 %v394
        %v451 = vpop.f32.mrb[0].mxu0
        %v452 = vadd.f32 0.0, %v451
        %v453 = vpop.f32.mrb[0].mxu0
        %v454 = vpop.f32.mrb[0].mxu0
        %v455 = vadd.f32 0.0, %v454
        %v456 = vpop.f32.mrb[0].mxu0
        %457 = vmatprep.mubr.bf16.mxu0 0
        %458 = vmatmul.mubr.bf16.gmra.mrb[0].mxu0 %v397
        %v459 = vpop.f32.mrb[0].mxu0
        %v460 = vadd.f32 0.0, %v459
        %v461 = vpop.f32.mrb[0].mxu0
        %v462 = vpop.f32.mrb[0].mxu0
        %v463 = vadd.f32 0.0, %v462
        %v464 = vpop.f32.mrb[0].mxu0
        %465 = vmatprep.mubr.bf16.mxu0 0
        %466 = vmatmul.mubr.bf16.gmra.mrb[0].mxu0 %v400
        %v467 = vpop.f32.mrb[0].mxu0
        %v468 = vadd.f32 0.0, %v467
        %v469 = vpop.f32.mrb[0].mxu0
        %v470 = vpop.f32.mrb[0].mxu0
        %v471 = vadd.f32 0.0, %v470
        %v472 = vpop.f32.mrb[0].mxu0
        %473 = vmatprep.mubr.bf16.mxu0 0
        %474 = vmatmul.mubr.bf16.gmra.mrb[0].mxu0 %v403
        %v475 = vpop.f32.mrb[0].mxu0
        %v476 = vadd.f32 0.0, %v475
        %v477 = vpop.f32.mrb[0].mxu0
        %v478 = vpop.f32.mrb[0].mxu0
        %v479 = vadd.f32 0.0, %v478
        %v480 = vpop.f32.mrb[0].mxu0
        %481 = vmatprep.mubr.bf16.mxu0 0
        %482 = vmatmul.mubr.bf16.gmra.mrb[0].mxu0 %v406
        %v483 = vpop.f32.mrb[0].mxu0
        %v484 = vadd.f32 0.0, %v483
        %v485 = vpop.f32.mrb[0].mxu0
        %v486 = vpop.f32.mrb[0].mxu0
        %v487 = vadd.f32 0.0, %v486
        %v488 = vpop.f32.mrb[0].mxu0
        %489 = vmatprep.mubr.bf16.mxu0 0
        %490 = vmatmul.mubr.bf16.gmra.mrb[0].mxu0 %v409
        %v491 = vpop.f32.mrb[0].mxu0
        %v492 = vadd.f32 0.0, %v491
        %v493 = vpop.f32.mrb[0].mxu0
        %v494 = vpop.f32.mrb[0].mxu0
        %v495 = vadd.f32 0.0, %v494
        %v496 = vpop.f32.mrb[0].mxu0
        %497 = vmatprep.mubr.bf16.mxu0 0
        %498 = vmatmul.mubr.bf16.gmra.mrb[0].mxu0 %v412
        %v499 = vpop.f32.mrb[0].mxu0
        %v500 = vadd.f32 0.0, %v499
        %v501 = vpop.f32.mrb[0].mxu0
        %v502 = vpop.f32.mrb[0].mxu0
        %v503 = vadd.f32 0.0, %v502
        %v504 = vpop.f32.mrb[0].mxu0
        %505 = vmatprep.mubr.bf16.mxu0 0
        %506 = vmatmul.mubr.bf16.gmra.mrb[0].mxu0 %v415
        %v507 = vpop.f32.mrb[0].mxu0
        %v508 = vadd.f32 0.0, %v507
        %v509 = vpop.f32.mrb[0].mxu0
        %v510 = vpop.f32.mrb[0].mxu0
        %v511 = vadd.f32 0.0, %v510
        %v512 = vpop.f32.mrb[0].mxu0
        %513 = vdwg.mxu0
        %v514 = vpack.c.bf16 %v455, %v452
        %v515 = vpack.c.bf16 %v463, %v460
        %v516 = vpack.c.bf16 %v471, %v468
        %v517 = vpack.c.bf16 %v479, %v476
        %v518 = vpack.c.bf16 %v487, %v484
        %v519 = vpack.c.bf16 %v495, %v492
        %v520 = vpack.c.bf16 %v503, %v500
        %v521 = vpack.c.bf16 %v511, %v508
        %v526 = vunpack.c.l.b16 %v340
        %v527 = vunpack.c.l.b16 %v341
        %v528 = vunpack.c.l.b16 %v342
        %v529 = vunpack.c.l.b16 %v343
        %v530 = vpack.c.b16 %v527, %v526
        %v531 = vpack.c.b16 %v529, %v528
        %v533 = vsel %vm392, %v530, 0
        %v536 = vsel %vm392, %v531, 0
        %538 = vmatprep.subr.bf16.mxu0 0
        %539 = vmatpush1.bf16.msra.mxu0 %v514
        %540 = vmatprep.subr.bf16.mxu0 0
        %541 = vmatpush1.bf16.msra.mxu0 0
        %542 = vmatprep.subr.bf16.mxu0 0
        %543 = vmatpush1.bf16.msra.mxu0 0
        %544 = vmatprep.subr.bf16.mxu0 0
        %545 = vmatpush1.bf16.msra.mxu0 0
        %546 = vmatprep.subr.bf16.mxu0 0
        %547 = vmatpush1.bf16.msra.mxu0 0
        %548 = vmatprep.subr.bf16.mxu0 0
        %549 = vmatpush1.bf16.msra.mxu0 0
        %550 = vmatprep.subr.bf16.mxu0 0
        %551 = vmatpush1.bf16.msra.mxu0 0
        %552 = vmatprep.subr.bf16.mxu0 0
        %553 = vmatpush1.bf16.msra.mxu0 0
        %554 = vmatprep.subr.bf16.mxu0 0
        %555 = vmatpush1.bf16.msra.mxu0 0
        %556 = vmatprep.subr.bf16.mxu0 0
        %557 = vmatpush1.bf16.msra.mxu0 0
        %558 = vmatprep.subr.bf16.mxu0 0
        %559 = vmatpush1.bf16.msra.mxu0 0
        %560 = vmatprep.subr.bf16.mxu0 0
        %561 = vmatpush1.bf16.msra.mxu0 0
        %562 = vmatprep.subr.bf16.mxu0 0
        %563 = vmatpush1.bf16.msra.mxu0 0
        %564 = vmatprep.subr.bf16.mxu0 0
        %565 = vmatpush1.bf16.msra.mxu0 0
        %566 = vmatprep.subr.bf16.mxu0 0
        %567 = vmatpush1.bf16.msra.mxu0 0
        %568 = vmatprep.subr.bf16.mxu0 0
        %569 = vmatpush1.bf16.msra.mxu0 0
        %570 = vmatprep.mubr.bf16.mxu0 0
        %571 = vmatmul.mubr.bf16.gmra.mrb[0].mxu0 %v533
        %v572 = vpop.f32.mrb[0].mxu0
        %v573 = vadd.f32 0.0, %v572
        %v574 = vpop.f32.mrb[0].mxu0
        %v575 = vpop.f32.mrb[0].mxu0
        %v576 = vadd.f32 0.0, %v575
        %v577 = vpop.f32.mrb[0].mxu0
        %578 = vmatprep.mubr.bf16.mxu0 0
        %579 = vmatmul.mubr.bf16.gmra.mrb[0].mxu0 %v536
        %v580 = vpop.f32.mrb[0].mxu0
        %v581 = vadd.f32 0.0, %v580
        %v582 = vpop.f32.mrb[0].mxu0
        %v583 = vpop.f32.mrb[0].mxu0
        %v584 = vadd.f32 0.0, %v583
        %v585 = vpop.f32.mrb[0].mxu0
        %586 = vdwg.mxu0
        %587 = vmatprep.subr.bf16.mxu0 0
        %588 = vmatpush1.bf16.msra.mxu0 %v515
        %589 = vmatprep.subr.bf16.mxu0 0
        %590 = vmatpush1.bf16.msra.mxu0 0
        %591 = vmatprep.subr.bf16.mxu0 0
        %592 = vmatpush1.bf16.msra.mxu0 0
        %593 = vmatprep.subr.bf16.mxu0 0
        %594 = vmatpush1.bf16.msra.mxu0 0
        %595 = vmatprep.subr.bf16.mxu0 0
        %596 = vmatpush1.bf16.msra.mxu0 0
        %597 = vmatprep.subr.bf16.mxu0 0
        %598 = vmatpush1.bf16.msra.mxu0 0
        %599 = vmatprep.subr.bf16.mxu0 0
        %600 = vmatpush1.bf16.msra.mxu0 0
        %601 = vmatprep.subr.bf16.mxu0 0
        %602 = vmatpush1.bf16.msra.mxu0 0
        %603 = vmatprep.subr.bf16.mxu0 0
        %604 = vmatpush1.bf16.msra.mxu0 0
        %605 = vmatprep.subr.bf16.mxu0 0
        %606 = vmatpush1.bf16.msra.mxu0 0
        %607 = vmatprep.subr.bf16.mxu0 0
        %608 = vmatpush1.bf16.msra.mxu0 0
        %609 = vmatprep.subr.bf16.mxu0 0
        %610 = vmatpush1.bf16.msra.mxu0 0
        %611 = vmatprep.subr.bf16.mxu0 0
        %612 = vmatpush1.bf16.msra.mxu0 0
        %613 = vmatprep.subr.bf16.mxu0 0
        %614 = vmatpush1.bf16.msra.mxu0 0
        %615 = vmatprep.subr.bf16.mxu0 0
        %616 = vmatpush1.bf16.msra.mxu0 0
        %617 = vmatprep.subr.bf16.mxu0 0
        %618 = vmatpush1.bf16.msra.mxu0 0
        %619 = vmatprep.mubr.bf16.mxu0 0
        %620 = vmatmul.mubr.bf16.gmra.mrb[0].mxu0 %v533
        %v621 = vpop.f32.mrb[0].mxu0
        %v622 = vadd.f32 0.0, %v621
        %v623 = vpop.f32.mrb[0].mxu0
        %v624 = vpop.f32.mrb[0].mxu0
        %v625 = vadd.f32 0.0, %v624
        %v626 = vpop.f32.mrb[0].mxu0
        %627 = vmatprep.mubr.bf16.mxu0 0
        %628 = vmatmul.mubr.bf16.gmra.mrb[0].mxu0 %v536
        %v629 = vpop.f32.mrb[0].mxu0
        %v630 = vadd.f32 0.0, %v629
        %v631 = vpop.f32.mrb[0].mxu0
        %v632 = vpop.f32.mrb[0].mxu0
        %v633 = vadd.f32 0.0, %v632
        %v634 = vpop.f32.mrb[0].mxu0
        %635 = vdwg.mxu0
        %636 = vmatprep.subr.bf16.mxu0 0
        %637 = vmatpush1.bf16.msra.mxu0 %v516
        %638 = vmatprep.subr.bf16.mxu0 0
        %639 = vmatpush1.bf16.msra.mxu0 0
        %640 = vmatprep.subr.bf16.mxu0 0
        %641 = vmatpush1.bf16.msra.mxu0 0
        %642 = vmatprep.subr.bf16.mxu0 0
        %643 = vmatpush1.bf16.msra.mxu0 0
        %644 = vmatprep.subr.bf16.mxu0 0
        %645 = vmatpush1.bf16.msra.mxu0 0
        %646 = vmatprep.subr.bf16.mxu0 0
        %647 = vmatpush1.bf16.msra.mxu0 0
        %648 = vmatprep.subr.bf16.mxu0 0
        %649 = vmatpush1.bf16.msra.mxu0 0
        %650 = vmatprep.subr.bf16.mxu0 0
        %651 = vmatpush1.bf16.msra.mxu0 0
        %652 = vmatprep.subr.bf16.mxu0 0
        %653 = vmatpush1.bf16.msra.mxu0 0
        %654 = vmatprep.subr.bf16.mxu0 0
        %655 = vmatpush1.bf16.msra.mxu0 0
        %656 = vmatprep.subr.bf16.mxu0 0
        %657 = vmatpush1.bf16.msra.mxu0 0
        %658 = vmatprep.subr.bf16.mxu0 0
        %659 = vmatpush1.bf16.msra.mxu0 0
        %660 = vmatprep.subr.bf16.mxu0 0
        %661 = vmatpush1.bf16.msra.mxu0 0
        %662 = vmatprep.subr.bf16.mxu0 0
        %663 = vmatpush1.bf16.msra.mxu0 0
        %664 = vmatprep.subr.bf16.mxu0 0
        %665 = vmatpush1.bf16.msra.mxu0 0
        %666 = vmatprep.subr.bf16.mxu0 0
        %667 = vmatpush1.bf16.msra.mxu0 0
        %668 = vmatprep.mubr.bf16.mxu0 0
        %669 = vmatmul.mubr.bf16.gmra.mrb[0].mxu0 %v533
        %v670 = vpop.f32.mrb[0].mxu0
        %v671 = vadd.f32 0.0, %v670
        %v672 = vpop.f32.mrb[0].mxu0
        %v673 = vpop.f32.mrb[0].mxu0
        %v674 = vadd.f32 0.0, %v673
        %v675 = vpop.f32.mrb[0].mxu0
        %676 = vmatprep.mubr.bf16.mxu0 0
        %677 = vmatmul.mubr.bf16.gmra.mrb[0].mxu0 %v536
        %v678 = vpop.f32.mrb[0].mxu0
        %v679 = vadd.f32 0.0, %v678
        %v680 = vpop.f32.mrb[0].mxu0
        %v681 = vpop.f32.mrb[0].mxu0
        %v682 = vadd.f32 0.0, %v681
        %v683 = vpop.f32.mrb[0].mxu0
        %684 = vdwg.mxu0
        %685 = vmatprep.subr.bf16.mxu0 0
        %686 = vmatpush1.bf16.msra.mxu0 %v517
        %687 = vmatprep.subr.bf16.mxu0 0
        %688 = vmatpush1.bf16.msra.mxu0 0
        %689 = vmatprep.subr.bf16.mxu0 0
        %690 = vmatpush1.bf16.msra.mxu0 0
        %691 = vmatprep.subr.bf16.mxu0 0
        %692 = vmatpush1.bf16.msra.mxu0 0
        %693 = vmatprep.subr.bf16.mxu0 0
        %694 = vmatpush1.bf16.msra.mxu0 0
        %695 = vmatprep.subr.bf16.mxu0 0
        %696 = vmatpush1.bf16.msra.mxu0 0
        %697 = vmatprep.subr.bf16.mxu0 0
        %698 = vmatpush1.bf16.msra.mxu0 0
        %699 = vmatprep.subr.bf16.mxu0 0
        %700 = vmatpush1.bf16.msra.mxu0 0
        %701 = vmatprep.subr.bf16.mxu0 0
        %702 = vmatpush1.bf16.msra.mxu0 0
        %703 = vmatprep.subr.bf16.mxu0 0
        %704 = vmatpush1.bf16.msra.mxu0 0
        %705 = vmatprep.subr.bf16.mxu0 0
        %706 = vmatpush1.bf16.msra.mxu0 0
        %707 = vmatprep.subr.bf16.mxu0 0
        %708 = vmatpush1.bf16.msra.mxu0 0
        %709 = vmatprep.subr.bf16.mxu0 0
        %710 = vmatpush1.bf16.msra.mxu0 0
        %711 = vmatprep.subr.bf16.mxu0 0
        %712 = vmatpush1.bf16.msra.mxu0 0
        %713 = vmatprep.subr.bf16.mxu0 0
        %714 = vmatpush1.bf16.msra.mxu0 0
        %715 = vmatprep.subr.bf16.mxu0 0
        %716 = vmatpush1.bf16.msra.mxu0 0
        %717 = vmatprep.mubr.bf16.mxu0 0
        %718 = vmatmul.mubr.bf16.gmra.mrb[0].mxu0 %v533
        %v719 = vpop.f32.mrb[0].mxu0
        %v720 = vadd.f32 0.0, %v719
        %v721 = vpop.f32.mrb[0].mxu0
        %v722 = vpop.f32.mrb[0].mxu0
        %v723 = vadd.f32 0.0, %v722
        %v724 = vpop.f32.mrb[0].mxu0
        %725 = vmatprep.mubr.bf16.mxu0 0
        %726 = vmatmul.mubr.bf16.gmra.mrb[0].mxu0 %v536
        %v727 = vpop.f32.mrb[0].mxu0
        %v728 = vadd.f32 0.0, %v727
        %v729 = vpop.f32.mrb[0].mxu0
        %v730 = vpop.f32.mrb[0].mxu0
        %v731 = vadd.f32 0.0, %v730
        %v732 = vpop.f32.mrb[0].mxu0
        %733 = vdwg.mxu0
        %734 = vmatprep.subr.bf16.mxu0 0
        %735 = vmatpush1.bf16.msra.mxu0 %v518
        %736 = vmatprep.subr.bf16.mxu0 0
        %737 = vmatpush1.bf16.msra.mxu0 0
        %738 = vmatprep.subr.bf16.mxu0 0
        %739 = vmatpush1.bf16.msra.mxu0 0
        %740 = vmatprep.subr.bf16.mxu0 0
        %741 = vmatpush1.bf16.msra.mxu0 0
        %742 = vmatprep.subr.bf16.mxu0 0
        %743 = vmatpush1.bf16.msra.mxu0 0
        %744 = vmatprep.subr.bf16.mxu0 0
        %745 = vmatpush1.bf16.msra.mxu0 0
        %746 = vmatprep.subr.bf16.mxu0 0
        %747 = vmatpush1.bf16.msra.mxu0 0
        %748 = vmatprep.subr.bf16.mxu0 0
        %749 = vmatpush1.bf16.msra.mxu0 0
        %750 = vmatprep.subr.bf16.mxu0 0
        %751 = vmatpush1.bf16.msra.mxu0 0
        %752 = vmatprep.subr.bf16.mxu0 0
        %753 = vmatpush1.bf16.msra.mxu0 0
        %754 = vmatprep.subr.bf16.mxu0 0
        %755 = vmatpush1.bf16.msra.mxu0 0
        %756 = vmatprep.subr.bf16.mxu0 0
        %757 = vmatpush1.bf16.msra.mxu0 0
        %758 = vmatprep.subr.bf16.mxu0 0
        %759 = vmatpush1.bf16.msra.mxu0 0
        %760 = vmatprep.subr.bf16.mxu0 0
        %761 = vmatpush1.bf16.msra.mxu0 0
        %762 = vmatprep.subr.bf16.mxu0 0
        %763 = vmatpush1.bf16.msra.mxu0 0
        %764 = vmatprep.subr.bf16.mxu0 0
        %765 = vmatpush1.bf16.msra.mxu0 0
        %766 = vmatprep.mubr.bf16.mxu0 0
        %767 = vmatmul.mubr.bf16.gmra.mrb[0].mxu0 %v533
        %v768 = vpop.f32.mrb[0].mxu0
        %v769 = vadd.f32 0.0, %v768
        %v770 = vpop.f32.mrb[0].mxu0
        %v771 = vpop.f32.mrb[0].mxu0
        %v772 = vadd.f32 0.0, %v771
        %v773 = vpop.f32.mrb[0].mxu0
        %774 = vmatprep.mubr.bf16.mxu0 0
        %775 = vmatmul.mubr.bf16.gmra.mrb[0].mxu0 %v536
        %v776 = vpop.f32.mrb[0].mxu0
        %v777 = vadd.f32 0.0, %v776
        %v778 = vpop.f32.mrb[0].mxu0
        %v779 = vpop.f32.mrb[0].mxu0
        %v780 = vadd.f32 0.0, %v779
        %v781 = vpop.f32.mrb[0].mxu0
        %782 = vdwg.mxu0
        %783 = vmatprep.subr.bf16.mxu0 0
        %784 = vmatpush1.bf16.msra.mxu0 %v519
        %785 = vmatprep.subr.bf16.mxu0 0
        %786 = vmatpush1.bf16.msra.mxu0 0
        %787 = vmatprep.subr.bf16.mxu0 0
        %788 = vmatpush1.bf16.msra.mxu0 0
        %789 = vmatprep.subr.bf16.mxu0 0
        %790 = vmatpush1.bf16.msra.mxu0 0
        %791 = vmatprep.subr.bf16.mxu0 0
        %792 = vmatpush1.bf16.msra.mxu0 0
        %793 = vmatprep.subr.bf16.mxu0 0
        %794 = vmatpush1.bf16.msra.mxu0 0
        %795 = vmatprep.subr.bf16.mxu0 0
        %796 = vmatpush1.bf16.msra.mxu0 0
        %797 = vmatprep.subr.bf16.mxu0 0
        %798 = vmatpush1.bf16.msra.mxu0 0
        %799 = vmatprep.subr.bf16.mxu0 0
        %800 = vmatpush1.bf16.msra.mxu0 0
        %801 = vmatprep.subr.bf16.mxu0 0
        %802 = vmatpush1.bf16.msra.mxu0 0
        %803 = vmatprep.subr.bf16.mxu0 0
        %804 = vmatpush1.bf16.msra.mxu0 0
        %805 = vmatprep.subr.bf16.mxu0 0
        %806 = vmatpush1.bf16.msra.mxu0 0
        %807 = vmatprep.subr.bf16.mxu0 0
        %808 = vmatpush1.bf16.msra.mxu0 0
        %809 = vmatprep.subr.bf16.mxu0 0
        %810 = vmatpush1.bf16.msra.mxu0 0
        %811 = vmatprep.subr.bf16.mxu0 0
        %812 = vmatpush1.bf16.msra.mxu0 0
        %813 = vmatprep.subr.bf16.mxu0 0
        %814 = vmatpush1.bf16.msra.mxu0 0
        %815 = vmatprep.mubr.bf16.mxu0 0
        %816 = vmatmul.mubr.bf16.gmra.mrb[0].mxu0 %v533
        %v817 = vpop.f32.mrb[0].mxu0
        %v818 = vadd.f32 0.0, %v817
        %v819 = vpop.f32.mrb[0].mxu0
        %v820 = vpop.f32.mrb[0].mxu0
        %v821 = vadd.f32 0.0, %v820
        %v822 = vpop.f32.mrb[0].mxu0
        %823 = vmatprep.mubr.bf16.mxu0 0
        %824 = vmatmul.mubr.bf16.gmra.mrb[0].mxu0 %v536
        %v825 = vpop.f32.mrb[0].mxu0
        %v826 = vadd.f32 0.0, %v825
        %v827 = vpop.f32.mrb[0].mxu0
        %v828 = vpop.f32.mrb[0].mxu0
        %v829 = vadd.f32 0.0, %v828
        %v830 = vpop.f32.mrb[0].mxu0
        %831 = vdwg.mxu0
        %832 = vmatprep.subr.bf16.mxu0 0
        %833 = vmatpush1.bf16.msra.mxu0 %v520
        %834 = vmatprep.subr.bf16.mxu0 0
        %835 = vmatpush1.bf16.msra.mxu0 0
        %836 = vmatprep.subr.bf16.mxu0 0
        %837 = vmatpush1.bf16.msra.mxu0 0
        %838 = vmatprep.subr.bf16.mxu0 0
        %839 = vmatpush1.bf16.msra.mxu0 0
        %840 = vmatprep.subr.bf16.mxu0 0
        %841 = vmatpush1.bf16.msra.mxu0 0
        %842 = vmatprep.subr.bf16.mxu0 0
        %843 = vmatpush1.bf16.msra.mxu0 0
        %844 = vmatprep.subr.bf16.mxu0 0
        %845 = vmatpush1.bf16.msra.mxu0 0
        %846 = vmatprep.subr.bf16.mxu0 0
        %847 = vmatpush1.bf16.msra.mxu0 0
        %848 = vmatprep.subr.bf16.mxu0 0
        %849 = vmatpush1.bf16.msra.mxu0 0
        %850 = vmatprep.subr.bf16.mxu0 0
        %851 = vmatpush1.bf16.msra.mxu0 0
        %852 = vmatprep.subr.bf16.mxu0 0
        %853 = vmatpush1.bf16.msra.mxu0 0
        %854 = vmatprep.subr.bf16.mxu0 0
        %855 = vmatpush1.bf16.msra.mxu0 0
        %856 = vmatprep.subr.bf16.mxu0 0
        %857 = vmatpush1.bf16.msra.mxu0 0
        %858 = vmatprep.subr.bf16.mxu0 0
        %859 = vmatpush1.bf16.msra.mxu0 0
        %860 = vmatprep.subr.bf16.mxu0 0
        %861 = vmatpush1.bf16.msra.mxu0 0
        %862 = vmatprep.subr.bf16.mxu0 0
        %863 = vmatpush1.bf16.msra.mxu0 0
        %864 = vmatprep.mubr.bf16.mxu0 0
        %865 = vmatmul.mubr.bf16.gmra.mrb[0].mxu0 %v533
        %v866 = vpop.f32.mrb[0].mxu0
        %v867 = vadd.f32 0.0, %v866
        %v868 = vpop.f32.mrb[0].mxu0
        %v869 = vpop.f32.mrb[0].mxu0
        %v870 = vadd.f32 0.0, %v869
        %v871 = vpop.f32.mrb[0].mxu0
        %872 = vmatprep.mubr.bf16.mxu0 0
        %873 = vmatmul.mubr.bf16.gmra.mrb[0].mxu0 %v536
        %v874 = vpop.f32.mrb[0].mxu0
        %v875 = vadd.f32 0.0, %v874
        %v876 = vpop.f32.mrb[0].mxu0
        %v877 = vpop.f32.mrb[0].mxu0
        %v878 = vadd.f32 0.0, %v877
        %v879 = vpop.f32.mrb[0].mxu0
        %880 = vdwg.mxu0
        %881 = vmatprep.subr.bf16.mxu0 0
        %882 = vmatpush1.bf16.msra.mxu0 %v521
        %883 = vmatprep.subr.bf16.mxu0 0
        %884 = vmatpush1.bf16.msra.mxu0 0
        %885 = vmatprep.subr.bf16.mxu0 0
        %886 = vmatpush1.bf16.msra.mxu0 0
        %887 = vmatprep.subr.bf16.mxu0 0
        %888 = vmatpush1.bf16.msra.mxu0 0
        %889 = vmatprep.subr.bf16.mxu0 0
        %890 = vmatpush1.bf16.msra.mxu0 0
        %891 = vmatprep.subr.bf16.mxu0 0
        %892 = vmatpush1.bf16.msra.mxu0 0
        %893 = vmatprep.subr.bf16.mxu0 0
        %894 = vmatpush1.bf16.msra.mxu0 0
        %895 = vmatprep.subr.bf16.mxu0 0
        %896 = vmatpush1.bf16.msra.mxu0 0
        %897 = vmatprep.subr.bf16.mxu0 0
        %898 = vmatpush1.bf16.msra.mxu0 0
        %899 = vmatprep.subr.bf16.mxu0 0
        %900 = vmatpush1.bf16.msra.mxu0 0
        %901 = vmatprep.subr.bf16.mxu0 0
        %902 = vmatpush1.bf16.msra.mxu0 0
        %903 = vmatprep.subr.bf16.mxu0 0
        %904 = vmatpush1.bf16.msra.mxu0 0
        %905 = vmatprep.subr.bf16.mxu0 0
        %906 = vmatpush1.bf16.msra.mxu0 0
        %907 = vmatprep.subr.bf16.mxu0 0
        %908 = vmatpush1.bf16.msra.mxu0 0
        %909 = vmatprep.subr.bf16.mxu0 0
        %910 = vmatpush1.bf16.msra.mxu0 0
        %911 = vmatprep.subr.bf16.mxu0 0
        %912 = vmatpush1.bf16.msra.mxu0 0
        %913 = vmatprep.mubr.bf16.mxu0 0
        %914 = vmatmul.mubr.bf16.gmra.mrb[0].mxu0 %v533
        %v915 = vpop.f32.mrb[0].mxu0
        %v916 = vadd.f32 0.0, %v915
        %v917 = vpop.f32.mrb[0].mxu0
        %v918 = vpop.f32.mrb[0].mxu0
        %v919 = vadd.f32 0.0, %v918
        %v920 = vpop.f32.mrb[0].mxu0
        %921 = vmatprep.mubr.bf16.mxu0 0
        %922 = vmatmul.mubr.bf16.gmra.mrb[0].mxu0 %v536
        %v923 = vpop.f32.mrb[0].mxu0
        %v924 = vadd.f32 0.0, %v923
        %v925 = vpop.f32.mrb[0].mxu0
        %v926 = vpop.f32.mrb[0].mxu0
        %v927 = vadd.f32 0.0, %v926
        %v928 = vpop.f32.mrb[0].mxu0
        %929 = vdwg.mxu0
        %v930 = vld [vmem:[%s264] sm:$0xf]
        %v931 = vld [vmem:[%s264 + $0x4] sm:$0xf]
        %v932 = vld [vmem:[%s264 + $0x8] sm:$0xf]
        %v933 = vld [vmem:[%s264 + $0xc] sm:$0xf]
        %v934 = vunpack.c.l.b16 %v930
        %v935 = vunpack.c.l.b16 %v931
        %v936 = vunpack.c.l.b16 %v932
        %v937 = vunpack.c.l.b16 %v933
        %s938 = smul.u32 %s27, 8
        %v939 = vlaneseq
        %v940 = vshrl.u32 %v939, 7
        %v941 = vstv %s938
        %v942 = vadd.s32 %v941, %v940
        %v943 = vlaneseq
        %v944 = vshrl.u32 %v943, 7
        %v945 = vsub.s32 0, %v944
        %v946 = vrot.slane %v942, %v945
        %v947 = vlaneseq
        %v948 = vshrl.u32 %v947, 7
        %v949 = vsub.s32 1, %v948
        %v950 = vrot.slane %v942, %v949
        %v951 = vlaneseq
        %v952 = vshrl.u32 %v951, 7
        %v953 = vsub.s32 2, %v952
        %v954 = vrot.slane %v942, %v953
        %v955 = vlaneseq
        %v956 = vshrl.u32 %v955, 7
        %v957 = vsub.s32 3, %v956
        %v958 = vrot.slane %v942, %v957
        %v959 = vlaneseq
        %v960 = vshrl.u32 %v959, 7
        %v961 = vsub.s32 4, %v960
        %v962 = vrot.slane %v942, %v961
        %v963 = vlaneseq
        %v964 = vshrl.u32 %v963, 7
        %v965 = vsub.s32 5, %v964
        %v966 = vrot.slane %v942, %v965
        %v967 = vlaneseq
        %v968 = vshrl.u32 %v967, 7
        %v969 = vsub.s32 6, %v968
        %v970 = vrot.slane %v942, %v969
        %v971 = vlaneseq
        %v972 = vshrl.u32 %v971, 7
        %v973 = vsub.s32 7, %v972
        %v974 = vrot.slane %v942, %v973
        %vm975 = vcmp.eq.s32.totalorder %v934, %v946
        %vm976 = vcmp.eq.s32.totalorder %v935, %v946
        %vm977 = vcmp.eq.s32.totalorder %v936, %v946
        %vm978 = vcmp.eq.s32.totalorder %v937, %v946
        %vm979 = vcmp.eq.s32.totalorder %v934, %v950
        %vm980 = vcmp.eq.s32.totalorder %v935, %v950
        %vm981 = vcmp.eq.s32.totalorder %v936, %v950
        %vm982 = vcmp.eq.s32.totalorder %v937, %v950
        %vm983 = vcmp.eq.s32.totalorder %v934, %v954
        %vm984 = vcmp.eq.s32.totalorder %v935, %v954
        %vm985 = vcmp.eq.s32.totalorder %v936, %v954
        %vm986 = vcmp.eq.s32.totalorder %v937, %v954
        %vm987 = vcmp.eq.s32.totalorder %v934, %v958
        %vm988 = vcmp.eq.s32.totalorder %v935, %v958
        %vm989 = vcmp.eq.s32.totalorder %v936, %v958
        %vm990 = vcmp.eq.s32.totalorder %v937, %v958
        %vm991 = vcmp.eq.s32.totalorder %v934, %v962
        %vm992 = vcmp.eq.s32.totalorder %v935, %v962
        %vm993 = vcmp.eq.s32.totalorder %v936, %v962
        %vm994 = vcmp.eq.s32.totalorder %v937, %v962
        %vm995 = vcmp.eq.s32.totalorder %v934, %v966
        %vm996 = vcmp.eq.s32.totalorder %v935, %v966
        %vm997 = vcmp.eq.s32.totalorder %v936, %v966
        %vm998 = vcmp.eq.s32.totalorder %v937, %v966
        %vm999 = vcmp.eq.s32.totalorder %v934, %v970
        %vm1000 = vcmp.eq.s32.totalorder %v935, %v970
        %vm1001 = vcmp.eq.s32.totalorder %v936, %v970
        %vm1002 = vcmp.eq.s32.totalorder %v937, %v970
        %vm1003 = vcmp.eq.s32.totalorder %v934, %v974
        %vm1004 = vcmp.eq.s32.totalorder %v935, %v974
        %vm1005 = vcmp.eq.s32.totalorder %v936, %v974
        %vm1006 = vcmp.eq.s32.totalorder %v937, %v974
        %vm1007 = vcmp.ne.s32.totalorder %v934, 255
        %vm1008 = vcmp.ne.s32.totalorder %v935, 255
        %vm1009 = vcmp.ne.s32.totalorder %v936, 255
        %vm1010 = vcmp.ne.s32.totalorder %v937, 255
        %v1011 = vsel %vm1007, 1, 0
        %v1012 = vsel %vm1008, 1, 0
        %v1013 = vsel %vm1009, 1, 0
        %v1014 = vsel %vm1010, 1, 0
        %vm1015 = vcmp.eq.s32.totalorder %v1011, 1
        %vm1016 = vcmp.eq.s32.totalorder %v1012, 1
        %vm1017 = vcmp.eq.s32.totalorder %v1013, 1
        %vm1018 = vcmp.eq.s32.totalorder %v1014, 1
        %vm1019 = vmand %vm975, %vm1015
        %vm1020 = vmand %vm976, %vm1016
        %vm1021 = vmand %vm977, %vm1017
        %vm1022 = vmand %vm978, %vm1018
        %vm1023 = vmand %vm979, %vm1015
        %vm1024 = vmand %vm980, %vm1016
        %vm1025 = vmand %vm981, %vm1017
        %vm1026 = vmand %vm982, %vm1018
        %vm1027 = vmand %vm983, %vm1015
        %vm1028 = vmand %vm984, %vm1016
        %vm1029 = vmand %vm985, %vm1017
        %vm1030 = vmand %vm986, %vm1018
        %vm1031 = vmand %vm987, %vm1015
        %vm1032 = vmand %vm988, %vm1016
        %vm1033 = vmand %vm989, %vm1017
        %vm1034 = vmand %vm990, %vm1018
        %vm1035 = vmand %vm991, %vm1015
        %vm1036 = vmand %vm992, %vm1016
        %vm1037 = vmand %vm993, %vm1017
        %vm1038 = vmand %vm994, %vm1018
        %vm1039 = vmand %vm995, %vm1015
        %vm1040 = vmand %vm996, %vm1016
        %vm1041 = vmand %vm997, %vm1017
        %vm1042 = vmand %vm998, %vm1018
        %vm1043 = vmand %vm999, %vm1015
        %vm1044 = vmand %vm1000, %vm1016
        %vm1045 = vmand %vm1001, %vm1017
        %vm1046 = vmand %vm1002, %vm1018
        %vm1047 = vmand %vm1003, %vm1015
        %vm1048 = vmand %vm1004, %vm1016
        %vm1049 = vmand %vm1005, %vm1017
        %vm1050 = vmand %vm1006, %vm1018
        %v1051 = vsel %vm1019, 1.0, 0.0
        %v1052 = vsel %vm1020, 1.0, 0.0
        %v1053 = vsel %vm1021, 1.0, 0.0
        %v1054 = vsel %vm1022, 1.0, 0.0
        %v1055 = vsel %vm1023, 1.0, 0.0
        %v1056 = vsel %vm1024, 1.0, 0.0
        %v1057 = vsel %vm1025, 1.0, 0.0
        %v1058 = vsel %vm1026, 1.0, 0.0
        %v1059 = vsel %vm1027, 1.0, 0.0
        %v1060 = vsel %vm1028, 1.0, 0.0
        %v1061 = vsel %vm1029, 1.0, 0.0
        %v1062 = vsel %vm1030, 1.0, 0.0
        %v1063 = vsel %vm1031, 1.0, 0.0
        %v1064 = vsel %vm1032, 1.0, 0.0
        %v1065 = vsel %vm1033, 1.0, 0.0
        %v1066 = vsel %vm1034, 1.0, 0.0
        %v1067 = vsel %vm1035, 1.0, 0.0
        %v1068 = vsel %vm1036, 1.0, 0.0
        %v1069 = vsel %vm1037, 1.0, 0.0
        %v1070 = vsel %vm1038, 1.0, 0.0
        %v1071 = vsel %vm1039, 1.0, 0.0
        %v1072 = vsel %vm1040, 1.0, 0.0
        %v1073 = vsel %vm1041, 1.0, 0.0
        %v1074 = vsel %vm1042, 1.0, 0.0
        %v1075 = vsel %vm1043, 1.0, 0.0
        %v1076 = vsel %vm1044, 1.0, 0.0
        %v1077 = vsel %vm1045, 1.0, 0.0
        %v1078 = vsel %vm1046, 1.0, 0.0
        %v1079 = vsel %vm1047, 1.0, 0.0
        %v1080 = vsel %vm1048, 1.0, 0.0
        %v1081 = vsel %vm1049, 1.0, 0.0
        %v1082 = vsel %vm1050, 1.0, 0.0
        %v1083 = vand.u32 2147483647, %v573
        %v1084 = vand.u32 2147483647, %v576
        %v1085 = vand.u32 2147483647, %v581
        %v1086 = vand.u32 2147483647, %v584
        %v1087 = vand.u32 2147483647, %v622
        %v1088 = vand.u32 2147483647, %v625
        %v1089 = vand.u32 2147483647, %v630
        %v1090 = vand.u32 2147483647, %v633
        %v1091 = vand.u32 2147483647, %v671
        %v1092 = vand.u32 2147483647, %v674
        %v1093 = vand.u32 2147483647, %v679
        %v1094 = vand.u32 2147483647, %v682
        %v1095 = vand.u32 2147483647, %v720
        %v1096 = vand.u32 2147483647, %v723
        %v1097 = vand.u32 2147483647, %v728
        %v1098 = vand.u32 2147483647, %v731
        %v1099 = vand.u32 2147483647, %v769
        %v1100 = vand.u32 2147483647, %v772
        %v1101 = vand.u32 2147483647, %v777
        %v1102 = vand.u32 2147483647, %v780
        %v1103 = vand.u32 2147483647, %v818
        %v1104 = vand.u32 2147483647, %v821
        %v1105 = vand.u32 2147483647, %v826
        %v1106 = vand.u32 2147483647, %v829
        %v1107 = vand.u32 2147483647, %v867
        %v1108 = vand.u32 2147483647, %v870
        %v1109 = vand.u32 2147483647, %v875
        %v1110 = vand.u32 2147483647, %v878
        %v1111 = vand.u32 2147483647, %v916
        %v1112 = vand.u32 2147483647, %v919
        %v1113 = vand.u32 2147483647, %v924
        %v1114 = vand.u32 2147483647, %v927
        %v1115 = vsub.f32 0.0, %v1083
        %v1116 = vsub.f32 0.0, %v1084
        %v1117 = vsub.f32 0.0, %v1085
        %v1118 = vsub.f32 0.0, %v1086
        %v1119 = vsub.f32 0.0, %v1087
        %v1120 = vsub.f32 0.0, %v1088
        %v1121 = vsub.f32 0.0, %v1089
        %v1122 = vsub.f32 0.0, %v1090
        %v1123 = vsub.f32 0.0, %v1091
        %v1124 = vsub.f32 0.0, %v1092
        %v1125 = vsub.f32 0.0, %v1093
        %v1126 = vsub.f32 0.0, %v1094
        %v1127 = vsub.f32 0.0, %v1095
        %v1128 = vsub.f32 0.0, %v1096
        %v1129 = vsub.f32 0.0, %v1097
        %v1130 = vsub.f32 0.0, %v1098
        %v1131 = vsub.f32 0.0, %v1099
        %v1132 = vsub.f32 0.0, %v1100
        %v1133 = vsub.f32 0.0, %v1101
        %v1134 = vsub.f32 0.0, %v1102
        %v1135 = vsub.f32 0.0, %v1103
        %v1136 = vsub.f32 0.0, %v1104
        %v1137 = vsub.f32 0.0, %v1105
        %v1138 = vsub.f32 0.0, %v1106
        %v1139 = vsub.f32 0.0, %v1107
        %v1140 = vsub.f32 0.0, %v1108
        %v1141 = vsub.f32 0.0, %v1109
        %v1142 = vsub.f32 0.0, %v1110
        %v1143 = vsub.f32 0.0, %v1111
        %v1144 = vsub.f32 0.0, %v1112
        %v1145 = vsub.f32 0.0, %v1113
        %v1146 = vsub.f32 0.0, %v1114
        %v1147 = vmul.f32 %v1115, 1.442695
        %v1148 = vpow.pop %v1147
        %v1149 = vmul.f32 %v1116, 1.442695
        %v1150 = vpow.pop %v1149
        %v1151 = vmul.f32 %v1117, 1.442695
        %v1152 = vpow.pop %v1151
        %v1153 = vmul.f32 %v1118, 1.442695
        %v1154 = vpow.pop %v1153
        %v1155 = vmul.f32 %v1119, 1.442695
        %v1156 = vpow.pop %v1155
        %v1157 = vmul.f32 %v1120, 1.442695
        %v1158 = vpow.pop %v1157
        %v1159 = vmul.f32 %v1121, 1.442695
        %v1160 = vpow.pop %v1159
        %v1161 = vmul.f32 %v1122, 1.442695
        %v1162 = vpow.pop %v1161
        %v1163 = vmul.f32 %v1123, 1.442695
        %v1164 = vpow.pop %v1163
        %v1165 = vmul.f32 %v1124, 1.442695
        %v1166 = vpow.pop %v1165
        %v1167 = vmul.f32 %v1125, 1.442695
        %v1168 = vpow.pop %v1167
        %v1169 = vmul.f32 %v1126, 1.442695
        %v1170 = vpow.pop %v1169
        %v1171 = vmul.f32 %v1127, 1.442695
        %v1172 = vpow.pop %v1171
        %v1173 = vmul.f32 %v1128, 1.442695
        %v1174 = vpow.pop %v1173
        %v1175 = vmul.f32 %v1129, 1.442695
        %v1176 = vpow.pop %v1175
        %v1177 = vmul.f32 %v1130, 1.442695
        %v1178 = vpow.pop %v1177
        %v1179 = vmul.f32 %v1131, 1.442695
        %v1180 = vpow.pop %v1179
        %v1181 = vmul.f32 %v1132, 1.442695
        %v1182 = vpow.pop %v1181
        %v1183 = vmul.f32 %v1133, 1.442695
        %v1184 = vpow.pop %v1183
        %v1185 = vmul.f32 %v1134, 1.442695
        %v1186 = vpow.pop %v1185
        %v1187 = vmul.f32 %v1135, 1.442695
        %v1188 = vpow.pop %v1187
        %v1189 = vmul.f32 %v1136, 1.442695
        %v1190 = vpow.pop %v1189
        %v1191 = vmul.f32 %v1137, 1.442695
        %v1192 = vpow.pop %v1191
        %v1193 = vmul.f32 %v1138, 1.442695
        %v1194 = vpow.pop %v1193
        %v1195 = vmul.f32 %v1139, 1.442695
        %v1196 = vpow.pop %v1195
        %v1197 = vmul.f32 %v1140, 1.442695
        %v1198 = vpow.pop %v1197
        %v1199 = vmul.f32 %v1141, 1.442695
        %v1200 = vpow.pop %v1199
        %v1201 = vmul.f32 %v1142, 1.442695
        %v1202 = vpow.pop %v1201
        %v1203 = vmul.f32 %v1143, 1.442695
        %v1204 = vpow.pop %v1203
        %v1205 = vmul.f32 %v1144, 1.442695
        %v1206 = vpow.pop %v1205
        %v1207 = vmul.f32 %v1145, 1.442695
        %v1208 = vpow.pop %v1207
        %v1209 = vmul.f32 %v1146, 1.442695
        %v1210 = vpow.pop %v1209
        %v1211 = vadd.f32 %v1148, 1.0
        %v1212 = vadd.f32 %v1150, 1.0
        %v1213 = vadd.f32 %v1152, 1.0
        %v1214 = vadd.f32 %v1154, 1.0
        %v1215 = vadd.f32 %v1156, 1.0
        %v1216 = vadd.f32 %v1158, 1.0
        %v1217 = vadd.f32 %v1160, 1.0
        %v1218 = vadd.f32 %v1162, 1.0
        %v1219 = vadd.f32 %v1164, 1.0
        %v1220 = vadd.f32 %v1166, 1.0
        %v1221 = vadd.f32 %v1168, 1.0
        %v1222 = vadd.f32 %v1170, 1.0
        %v1223 = vadd.f32 %v1172, 1.0
        %v1224 = vadd.f32 %v1174, 1.0
        %v1225 = vadd.f32 %v1176, 1.0
        %v1226 = vadd.f32 %v1178, 1.0
        %v1227 = vadd.f32 %v1180, 1.0
        %v1228 = vadd.f32 %v1182, 1.0
        %v1229 = vadd.f32 %v1184, 1.0
        %v1230 = vadd.f32 %v1186, 1.0
        %v1231 = vadd.f32 %v1188, 1.0
        %v1232 = vadd.f32 %v1190, 1.0
        %v1233 = vadd.f32 %v1192, 1.0
        %v1234 = vadd.f32 %v1194, 1.0
        %v1235 = vadd.f32 %v1196, 1.0
        %v1236 = vadd.f32 %v1198, 1.0
        %v1237 = vadd.f32 %v1200, 1.0
        %v1238 = vadd.f32 %v1202, 1.0
        %v1239 = vadd.f32 %v1204, 1.0
        %v1240 = vadd.f32 %v1206, 1.0
        %v1241 = vadd.f32 %v1208, 1.0
        %v1242 = vadd.f32 %v1210, 1.0
        %v1243 = vrcp.pop %v1211
        %v1244 = vrcp.pop %v1212
        %v1245 = vrcp.pop %v1213
        %v1246 = vrcp.pop %v1214
        %v1247 = vrcp.pop %v1215
        %v1248 = vrcp.pop %v1216
        %v1249 = vrcp.pop %v1217
        %v1250 = vrcp.pop %v1218
        %v1251 = vrcp.pop %v1219
        %v1252 = vrcp.pop %v1220
        %v1253 = vrcp.pop %v1221
        %v1254 = vrcp.pop %v1222
        %v1255 = vrcp.pop %v1223
        %v1256 = vrcp.pop %v1224
        %v1257 = vrcp.pop %v1225
        %v1258 = vrcp.pop %v1226
        %v1259 = vrcp.pop %v1227
        %v1260 = vrcp.pop %v1228
        %v1261 = vrcp.pop %v1229
        %v1262 = vrcp.pop %v1230
        %v1263 = vrcp.pop %v1231
        %v1264 = vrcp.pop %v1232
        %v1265 = vrcp.pop %v1233
        %v1266 = vrcp.pop %v1234
        %v1267 = vrcp.pop %v1235
        %v1268 = vrcp.pop %v1236
        %v1269 = vrcp.pop %v1237
        %v1270 = vrcp.pop %v1238
        %v1271 = vrcp.pop %v1239
        %v1272 = vrcp.pop %v1240
        %v1273 = vrcp.pop %v1241
        %v1274 = vrcp.pop %v1242
        %vm1275 = vcmp.ge.f32.partialorder %v573, 0.0
        %vm1276 = vcmp.ge.f32.partialorder %v576, 0.0
        %vm1277 = vcmp.ge.f32.partialorder %v581, 0.0
        %vm1278 = vcmp.ge.f32.partialorder %v584, 0.0
        %vm1279 = vcmp.ge.f32.partialorder %v622, 0.0
        %vm1280 = vcmp.ge.f32.partialorder %v625, 0.0
        %vm1281 = vcmp.ge.f32.partialorder %v630, 0.0
        %vm1282 = vcmp.ge.f32.partialorder %v633, 0.0
        %vm1283 = vcmp.ge.f32.partialorder %v671, 0.0
        %vm1284 = vcmp.ge.f32.partialorder %v674, 0.0
        %vm1285 = vcmp.ge.f32.partialorder %v679, 0.0
        %vm1286 = vcmp.ge.f32.partialorder %v682, 0.0
        %vm1287 = vcmp.ge.f32.partialorder %v720, 0.0
        %vm1288 = vcmp.ge.f32.partialorder %v723, 0.0
        %vm1289 = vcmp.ge.f32.partialorder %v728, 0.0
        %vm1290 = vcmp.ge.f32.partialorder %v731, 0.0
        %vm1291 = vcmp.ge.f32.partialorder %v769, 0.0
        %vm1292 = vcmp.ge.f32.partialorder %v772, 0.0
        %vm1293 = vcmp.ge.f32.partialorder %v777, 0.0
        %vm1294 = vcmp.ge.f32.partialorder %v780, 0.0
        %vm1295 = vcmp.ge.f32.partialorder %v818, 0.0
        %vm1296 = vcmp.ge.f32.partialorder %v821, 0.0
        %vm1297 = vcmp.ge.f32.partialorder %v826, 0.0
        %vm1298 = vcmp.ge.f32.partialorder %v829, 0.0
        %vm1299 = vcmp.ge.f32.partialorder %v867, 0.0
        %vm1300 = vcmp.ge.f32.partialorder %v870, 0.0
        %vm1301 = vcmp.ge.f32.partialorder %v875, 0.0
        %vm1302 = vcmp.ge.f32.partialorder %v878, 0.0
        %vm1303 = vcmp.ge.f32.partialorder %v916, 0.0
        %vm1304 = vcmp.ge.f32.partialorder %v919, 0.0
        %vm1305 = vcmp.ge.f32.partialorder %v924, 0.0
        %vm1306 = vcmp.ge.f32.partialorder %v927, 0.0
        %v1307 = vmul.f32 %v1148, %v1243
        %v1308 = vmul.f32 %v1150, %v1244
        %v1309 = vmul.f32 %v1152, %v1245
        %v1310 = vmul.f32 %v1154, %v1246
        %v1311 = vmul.f32 %v1156, %v1247
        %v1312 = vmul.f32 %v1158, %v1248
        %v1313 = vmul.f32 %v1160, %v1249
        %v1314 = vmul.f32 %v1162, %v1250
        %v1315 = vmul.f32 %v1164, %v1251
        %v1316 = vmul.f32 %v1166, %v1252
        %v1317 = vmul.f32 %v1168, %v1253
        %v1318 = vmul.f32 %v1170, %v1254
        %v1319 = vmul.f32 %v1172, %v1255
        %v1320 = vmul.f32 %v1174, %v1256
        %v1321 = vmul.f32 %v1176, %v1257
        %v1322 = vmul.f32 %v1178, %v1258
        %v1323 = vmul.f32 %v1180, %v1259
        %v1324 = vmul.f32 %v1182, %v1260
        %v1325 = vmul.f32 %v1184, %v1261
        %v1326 = vmul.f32 %v1186, %v1262
        %v1327 = vmul.f32 %v1188, %v1263
        %v1328 = vmul.f32 %v1190, %v1264
        %v1329 = vmul.f32 %v1192, %v1265
        %v1330 = vmul.f32 %v1194, %v1266
        %v1331 = vmul.f32 %v1196, %v1267
        %v1332 = vmul.f32 %v1198, %v1268
        %v1333 = vmul.f32 %v1200, %v1269
        %v1334 = vmul.f32 %v1202, %v1270
        %v1335 = vmul.f32 %v1204, %v1271
        %v1336 = vmul.f32 %v1206, %v1272
        %v1337 = vmul.f32 %v1208, %v1273
        %v1338 = vmul.f32 %v1210, %v1274
        %v1339 = vsel %vm1275, %v1243, %v1307
        %v1340 = vsel %vm1276, %v1244, %v1308
        %v1341 = vsel %vm1277, %v1245, %v1309
        %v1342 = vsel %vm1278, %v1246, %v1310
        %v1343 = vsel %vm1279, %v1247, %v1311
        %v1344 = vsel %vm1280, %v1248, %v1312
        %v1345 = vsel %vm1281, %v1249, %v1313
        %v1346 = vsel %vm1282, %v1250, %v1314
        %v1347 = vsel %vm1283, %v1251, %v1315
        %v1348 = vsel %vm1284, %v1252, %v1316
        %v1349 = vsel %vm1285, %v1253, %v1317
        %v1350 = vsel %vm1286, %v1254, %v1318
        %v1351 = vsel %vm1287, %v1255, %v1319
        %v1352 = vsel %vm1288, %v1256, %v1320
        %v1353 = vsel %vm1289, %v1257, %v1321
        %v1354 = vsel %vm1290, %v1258, %v1322
        %v1355 = vsel %vm1291, %v1259, %v1323
        %v1356 = vsel %vm1292, %v1260, %v1324
        %v1357 = vsel %vm1293, %v1261, %v1325
        %v1358 = vsel %vm1294, %v1262, %v1326
        %v1359 = vsel %vm1295, %v1263, %v1327
        %v1360 = vsel %vm1296, %v1264, %v1328
        %v1361 = vsel %vm1297, %v1265, %v1329
        %v1362 = vsel %vm1298, %v1266, %v1330
        %v1363 = vsel %vm1299, %v1267, %v1331
        %v1364 = vsel %vm1300, %v1268, %v1332
        %v1365 = vsel %vm1301, %v1269, %v1333
        %v1366 = vsel %vm1302, %v1270, %v1334
        %v1367 = vsel %vm1303, %v1271, %v1335
        %v1368 = vsel %vm1304, %v1272, %v1336
        %v1369 = vsel %vm1305, %v1273, %v1337
        %v1370 = vsel %vm1306, %v1274, %v1338
        %v1371 = vmax.f32 %v573, 0.0
        %v1372 = vmax.f32 %v576, 0.0
        %v1373 = vmax.f32 %v581, 0.0
        %v1374 = vmax.f32 %v584, 0.0
        %v1375 = vmax.f32 %v622, 0.0
        %v1376 = vmax.f32 %v625, 0.0
        %v1377 = vmax.f32 %v630, 0.0
        %v1378 = vmax.f32 %v633, 0.0
        %v1379 = vmax.f32 %v671, 0.0
        %v1380 = vmax.f32 %v674, 0.0
        %v1381 = vmax.f32 %v679, 0.0
        %v1382 = vmax.f32 %v682, 0.0
        %v1383 = vmax.f32 %v720, 0.0
        %v1384 = vmax.f32 %v723, 0.0
        %v1385 = vmax.f32 %v728, 0.0
        %v1386 = vmax.f32 %v731, 0.0
        %v1387 = vmax.f32 %v769, 0.0
        %v1388 = vmax.f32 %v772, 0.0
        %v1389 = vmax.f32 %v777, 0.0
        %v1390 = vmax.f32 %v780, 0.0
        %v1391 = vmax.f32 %v818, 0.0
        %v1392 = vmax.f32 %v821, 0.0
        %v1393 = vmax.f32 %v826, 0.0
        %v1394 = vmax.f32 %v829, 0.0
        %v1395 = vmax.f32 %v867, 0.0
        %v1396 = vmax.f32 %v870, 0.0
        %v1397 = vmax.f32 %v875, 0.0
        %v1398 = vmax.f32 %v878, 0.0
        %v1399 = vmax.f32 %v916, 0.0
        %v1400 = vmax.f32 %v919, 0.0
        %v1401 = vmax.f32 %v924, 0.0
        %v1402 = vmax.f32 %v927, 0.0
        %v1403 = vmul.f32 %v573, %v1051
        %v1404 = vmul.f32 %v576, %v1052
        %v1405 = vmul.f32 %v581, %v1053
        %v1406 = vmul.f32 %v584, %v1054
        %v1407 = vmul.f32 %v622, %v1055
        %v1408 = vmul.f32 %v625, %v1056
        %v1409 = vmul.f32 %v630, %v1057
        %v1410 = vmul.f32 %v633, %v1058
        %v1411 = vmul.f32 %v671, %v1059
        %v1412 = vmul.f32 %v674, %v1060
        %v1413 = vmul.f32 %v679, %v1061
        %v1414 = vmul.f32 %v682, %v1062
        %v1415 = vmul.f32 %v720, %v1063
        %v1416 = vmul.f32 %v723, %v1064
        %v1417 = vmul.f32 %v728, %v1065
        %v1418 = vmul.f32 %v731, %v1066
        %v1419 = vmul.f32 %v769, %v1067
        %v1420 = vmul.f32 %v772, %v1068
        %v1421 = vmul.f32 %v777, %v1069
        %v1422 = vmul.f32 %v780, %v1070
        %v1423 = vmul.f32 %v818, %v1071
        %v1424 = vmul.f32 %v821, %v1072
        %v1425 = vmul.f32 %v826, %v1073
        %v1426 = vmul.f32 %v829, %v1074
        %v1427 = vmul.f32 %v867, %v1075
        %v1428 = vmul.f32 %v870, %v1076
        %v1429 = vmul.f32 %v875, %v1077
        %v1430 = vmul.f32 %v878, %v1078
        %v1431 = vmul.f32 %v916, %v1079
        %v1432 = vmul.f32 %v919, %v1080
        %v1433 = vmul.f32 %v924, %v1081
        %v1434 = vmul.f32 %v927, %v1082
        %v1435 = vsub.f32 %v1371, %v1403
        %v1436 = vsub.f32 %v1372, %v1404
        %v1437 = vsub.f32 %v1373, %v1405
        %v1438 = vsub.f32 %v1374, %v1406
        %v1439 = vsub.f32 %v1375, %v1407
        %v1440 = vsub.f32 %v1376, %v1408
        %v1441 = vsub.f32 %v1377, %v1409
        %v1442 = vsub.f32 %v1378, %v1410
        %v1443 = vsub.f32 %v1379, %v1411
        %v1444 = vsub.f32 %v1380, %v1412
        %v1445 = vsub.f32 %v1381, %v1413
        %v1446 = vsub.f32 %v1382, %v1414
        %v1447 = vsub.f32 %v1383, %v1415
        %v1448 = vsub.f32 %v1384, %v1416
        %v1449 = vsub.f32 %v1385, %v1417
        %v1450 = vsub.f32 %v1386, %v1418
        %v1451 = vsub.f32 %v1387, %v1419
        %v1452 = vsub.f32 %v1388, %v1420
        %v1453 = vsub.f32 %v1389, %v1421
        %v1454 = vsub.f32 %v1390, %v1422
        %v1455 = vsub.f32 %v1391, %v1423
        %v1456 = vsub.f32 %v1392, %v1424
        %v1457 = vsub.f32 %v1393, %v1425
        %v1458 = vsub.f32 %v1394, %v1426
        %v1459 = vsub.f32 %v1395, %v1427
        %v1460 = vsub.f32 %v1396, %v1428
        %v1461 = vsub.f32 %v1397, %v1429
        %v1462 = vsub.f32 %v1398, %v1430
        %v1463 = vsub.f32 %v1399, %v1431
        %v1464 = vsub.f32 %v1400, %v1432
        %v1465 = vsub.f32 %v1401, %v1433
        %v1466 = vsub.f32 %v1402, %v1434
        %v1467 = vlog2.pop %v1211
        %v1468 = vmul.f32 %v1467, 0.6931472
        %v1469 = vlog2.pop %v1212
        %v1470 = vmul.f32 %v1469, 0.6931472
        %v1471 = vlog2.pop %v1213
        %v1472 = vmul.f32 %v1471, 0.6931472
        %v1473 = vlog2.pop %v1214
        %v1474 = vmul.f32 %v1473, 0.6931472
        %v1475 = vlog2.pop %v1215
        %v1476 = vmul.f32 %v1475, 0.6931472
        %v1477 = vlog2.pop %v1216
        %v1478 = vmul.f32 %v1477, 0.6931472
        %v1479 = vlog2.pop %v1217
        %v1480 = vmul.f32 %v1479, 0.6931472
        %v1481 = vlog2.pop %v1218
        %v1482 = vmul.f32 %v1481, 0.6931472
        %v1483 = vlog2.pop %v1219
        %v1484 = vmul.f32 %v1483, 0.6931472
        %v1485 = vlog2.pop %v1220
        %v1486 = vmul.f32 %v1485, 0.6931472
        %v1487 = vlog2.pop %v1221
        %v1488 = vmul.f32 %v1487, 0.6931472
        %v1489 = vlog2.pop %v1222
        %v1490 = vmul.f32 %v1489, 0.6931472
        %v1491 = vlog2.pop %v1223
        %v1492 = vmul.f32 %v1491, 0.6931472
        %v1493 = vlog2.pop %v1224
        %v1494 = vmul.f32 %v1493, 0.6931472
        %v1495 = vlog2.pop %v1225
        %v1496 = vmul.f32 %v1495, 0.6931472
        %v1497 = vlog2.pop %v1226
        %v1498 = vmul.f32 %v1497, 0.6931472
        %v1499 = vlog2.pop %v1227
        %v1500 = vmul.f32 %v1499, 0.6931472
        %v1501 = vlog2.pop %v1228
        %v1502 = vmul.f32 %v1501, 0.6931472
        %v1503 = vlog2.pop %v1229
        %v1504 = vmul.f32 %v1503, 0.6931472
        %v1505 = vlog2.pop %v1230
        %v1506 = vmul.f32 %v1505, 0.6931472
        %v1507 = vlog2.pop %v1231
        %v1508 = vmul.f32 %v1507, 0.6931472
        %v1509 = vlog2.pop %v1232
        %v1510 = vmul.f32 %v1509, 0.6931472
        %v1511 = vlog2.pop %v1233
        %v1512 = vmul.f32 %v1511, 0.6931472
        %v1513 = vlog2.pop %v1234
        %v1514 = vmul.f32 %v1513, 0.6931472
        %v1515 = vlog2.pop %v1235
        %v1516 = vmul.f32 %v1515, 0.6931472
        %v1517 = vlog2.pop %v1236
        %v1518 = vmul.f32 %v1517, 0.6931472
        %v1519 = vlog2.pop %v1237
        %v1520 = vmul.f32 %v1519, 0.6931472
        %v1521 = vlog2.pop %v1238
        %v1522 = vmul.f32 %v1521, 0.6931472
        %v1523 = vlog2.pop %v1239
        %v1524 = vmul.f32 %v1523, 0.6931472
        %v1525 = vlog2.pop %v1240
        %v1526 = vmul.f32 %v1525, 0.6931472
        %v1527 = vlog2.pop %v1241
        %v1528 = vmul.f32 %v1527, 0.6931472
        %v1529 = vlog2.pop %v1242
        %v1530 = vmul.f32 %v1529, 0.6931472
        %v1531 = vadd.f32 %v1435, %v1468
        %v1532 = vadd.f32 %v1436, %v1470
        %v1533 = vadd.f32 %v1437, %v1472
        %v1534 = vadd.f32 %v1438, %v1474
        %v1535 = vadd.f32 %v1439, %v1476
        %v1536 = vadd.f32 %v1440, %v1478
        %v1537 = vadd.f32 %v1441, %v1480
        %v1538 = vadd.f32 %v1442, %v1482
        %v1539 = vadd.f32 %v1443, %v1484
        %v1540 = vadd.f32 %v1444, %v1486
        %v1541 = vadd.f32 %v1445, %v1488
        %v1542 = vadd.f32 %v1446, %v1490
        %v1543 = vadd.f32 %v1447, %v1492
        %v1544 = vadd.f32 %v1448, %v1494
        %v1545 = vadd.f32 %v1449, %v1496
        %v1546 = vadd.f32 %v1450, %v1498
        %v1547 = vadd.f32 %v1451, %v1500
        %v1548 = vadd.f32 %v1452, %v1502
        %v1549 = vadd.f32 %v1453, %v1504
        %v1550 = vadd.f32 %v1454, %v1506
        %v1551 = vadd.f32 %v1455, %v1508
        %v1552 = vadd.f32 %v1456, %v1510
        %v1553 = vadd.f32 %v1457, %v1512
        %v1554 = vadd.f32 %v1458, %v1514
        %v1555 = vadd.f32 %v1459, %v1516
        %v1556 = vadd.f32 %v1460, %v1518
        %v1557 = vadd.f32 %v1461, %v1520
        %v1558 = vadd.f32 %v1462, %v1522
        %v1559 = vadd.f32 %v1463, %v1524
        %v1560 = vadd.f32 %v1464, %v1526
        %v1561 = vadd.f32 %v1465, %v1528
        %v1562 = vadd.f32 %v1466, %v1530
        %v1563 = vmul.f32 %v1339, %v1051
        %v1564 = vmul.f32 %v1340, %v1052
        %v1565 = vmul.f32 %v1341, %v1053
        %v1566 = vmul.f32 %v1342, %v1054
        %v1567 = vmul.f32 %v1343, %v1055
        %v1568 = vmul.f32 %v1344, %v1056
        %v1569 = vmul.f32 %v1345, %v1057
        %v1570 = vmul.f32 %v1346, %v1058
        %v1571 = vmul.f32 %v1347, %v1059
        %v1572 = vmul.f32 %v1348, %v1060
        %v1573 = vmul.f32 %v1349, %v1061
        %v1574 = vmul.f32 %v1350, %v1062
        %v1575 = vmul.f32 %v1351, %v1063
        %v1576 = vmul.f32 %v1352, %v1064
        %v1577 = vmul.f32 %v1353, %v1065
        %v1578 = vmul.f32 %v1354, %v1066
        %v1579 = vmul.f32 %v1355, %v1067
        %v1580 = vmul.f32 %v1356, %v1068
        %v1581 = vmul.f32 %v1357, %v1069
        %v1582 = vmul.f32 %v1358, %v1070
        %v1583 = vmul.f32 %v1359, %v1071
        %v1584 = vmul.f32 %v1360, %v1072
        %v1585 = vmul.f32 %v1361, %v1073
        %v1586 = vmul.f32 %v1362, %v1074
        %v1587 = vmul.f32 %v1363, %v1075
        %v1588 = vmul.f32 %v1364, %v1076
        %v1589 = vmul.f32 %v1365, %v1077
        %v1590 = vmul.f32 %v1366, %v1078
        %v1591 = vmul.f32 %v1367, %v1079
        %v1592 = vmul.f32 %v1368, %v1080
        %v1593 = vmul.f32 %v1369, %v1081
        %v1594 = vmul.f32 %v1370, %v1082
        %v1595 = vsub.f32 1.0, %v1339
        %v1596 = vsub.f32 1.0, %v1340
        %v1597 = vsub.f32 1.0, %v1341
        %v1598 = vsub.f32 1.0, %v1342
        %v1599 = vsub.f32 1.0, %v1343
        %v1600 = vsub.f32 1.0, %v1344
        %v1601 = vsub.f32 1.0, %v1345
        %v1602 = vsub.f32 1.0, %v1346
        %v1603 = vsub.f32 1.0, %v1347
        %v1604 = vsub.f32 1.0, %v1348
        %v1605 = vsub.f32 1.0, %v1349
        %v1606 = vsub.f32 1.0, %v1350
        %v1607 = vsub.f32 1.0, %v1351
        %v1608 = vsub.f32 1.0, %v1352
        %v1609 = vsub.f32 1.0, %v1353
        %v1610 = vsub.f32 1.0, %v1354
        %v1611 = vsub.f32 1.0, %v1355
        %v1612 = vsub.f32 1.0, %v1356
        %v1613 = vsub.f32 1.0, %v1357
        %v1614 = vsub.f32 1.0, %v1358
        %v1615 = vsub.f32 1.0, %v1359
        %v1616 = vsub.f32 1.0, %v1360
        %v1617 = vsub.f32 1.0, %v1361
        %v1618 = vsub.f32 1.0, %v1362
        %v1619 = vsub.f32 1.0, %v1363
        %v1620 = vsub.f32 1.0, %v1364
        %v1621 = vsub.f32 1.0, %v1365
        %v1622 = vsub.f32 1.0, %v1366
        %v1623 = vsub.f32 1.0, %v1367
        %v1624 = vsub.f32 1.0, %v1368
        %v1625 = vsub.f32 1.0, %v1369
        %v1626 = vsub.f32 1.0, %v1370
        %v1627 = vsub.f32 1.0, %v1051
        %v1628 = vsub.f32 1.0, %v1052
        %v1629 = vsub.f32 1.0, %v1053
        %v1630 = vsub.f32 1.0, %v1054
        %v1631 = vsub.f32 1.0, %v1055
        %v1632 = vsub.f32 1.0, %v1056
        %v1633 = vsub.f32 1.0, %v1057
        %v1634 = vsub.f32 1.0, %v1058
        %v1635 = vsub.f32 1.0, %v1059
        %v1636 = vsub.f32 1.0, %v1060
        %v1637 = vsub.f32 1.0, %v1061
        %v1638 = vsub.f32 1.0, %v1062
        %v1639 = vsub.f32 1.0, %v1063
        %v1640 = vsub.f32 1.0, %v1064
        %v1641 = vsub.f32 1.0, %v1065
        %v1642 = vsub.f32 1.0, %v1066
        %v1643 = vsub.f32 1.0, %v1067
        %v1644 = vsub.f32 1.0, %v1068
        %v1645 = vsub.f32 1.0, %v1069
        %v1646 = vsub.f32 1.0, %v1070
        %v1647 = vsub.f32 1.0, %v1071
        %v1648 = vsub.f32 1.0, %v1072
        %v1649 = vsub.f32 1.0, %v1073
        %v1650 = vsub.f32 1.0, %v1074
        %v1651 = vsub.f32 1.0, %v1075
        %v1652 = vsub.f32 1.0, %v1076
        %v1653 = vsub.f32 1.0, %v1077
        %v1654 = vsub.f32 1.0, %v1078
        %v1655 = vsub.f32 1.0, %v1079
        %v1656 = vsub.f32 1.0, %v1080
        %v1657 = vsub.f32 1.0, %v1081
        %v1658 = vsub.f32 1.0, %v1082
        %v1659 = vmul.f32 %v1595, %v1627
        %v1660 = vmul.f32 %v1596, %v1628
        %v1661 = vmul.f32 %v1597, %v1629
        %v1662 = vmul.f32 %v1598, %v1630
        %v1663 = vmul.f32 %v1599, %v1631
        %v1664 = vmul.f32 %v1600, %v1632
        %v1665 = vmul.f32 %v1601, %v1633
        %v1666 = vmul.f32 %v1602, %v1634
        %v1667 = vmul.f32 %v1603, %v1635
        %v1668 = vmul.f32 %v1604, %v1636
        %v1669 = vmul.f32 %v1605, %v1637
        %v1670 = vmul.f32 %v1606, %v1638
        %v1671 = vmul.f32 %v1607, %v1639
        %v1672 = vmul.f32 %v1608, %v1640
        %v1673 = vmul.f32 %v1609, %v1641
        %v1674 = vmul.f32 %v1610, %v1642
        %v1675 = vmul.f32 %v1611, %v1643
        %v1676 = vmul.f32 %v1612, %v1644
        %v1677 = vmul.f32 %v1613, %v1645
        %v1678 = vmul.f32 %v1614, %v1646
        %v1679 = vmul.f32 %v1615, %v1647
        %v1680 = vmul.f32 %v1616, %v1648
        %v1681 = vmul.f32 %v1617, %v1649
        %v1682 = vmul.f32 %v1618, %v1650
        %v1683 = vmul.f32 %v1619, %v1651
        %v1684 = vmul.f32 %v1620, %v1652
        %v1685 = vmul.f32 %v1621, %v1653
        %v1686 = vmul.f32 %v1622, %v1654
        %v1687 = vmul.f32 %v1623, %v1655
        %v1688 = vmul.f32 %v1624, %v1656
        %v1689 = vmul.f32 %v1625, %v1657
        %v1690 = vmul.f32 %v1626, %v1658
        %v1691 = vadd.f32 %v1563, %v1659
        %v1692 = vadd.f32 %v1564, %v1660
        %v1693 = vadd.f32 %v1565, %v1661
        %v1694 = vadd.f32 %v1566, %v1662
        %v1695 = vadd.f32 %v1567, %v1663
        %v1696 = vadd.f32 %v1568, %v1664
        %v1697 = vadd.f32 %v1569, %v1665
        %v1698 = vadd.f32 %v1570, %v1666
        %v1699 = vadd.f32 %v1571, %v1667
        %v1700 = vadd.f32 %v1572, %v1668
        %v1701 = vadd.f32 %v1573, %v1669
        %v1702 = vadd.f32 %v1574, %v1670
        %v1703 = vadd.f32 %v1575, %v1671
        %v1704 = vadd.f32 %v1576, %v1672
        %v1705 = vadd.f32 %v1577, %v1673
        %v1706 = vadd.f32 %v1578, %v1674
        %v1707 = vadd.f32 %v1579, %v1675
        %v1708 = vadd.f32 %v1580, %v1676
        %v1709 = vadd.f32 %v1581, %v1677
        %v1710 = vadd.f32 %v1582, %v1678
        %v1711 = vadd.f32 %v1583, %v1679
        %v1712 = vadd.f32 %v1584, %v1680
        %v1713 = vadd.f32 %v1585, %v1681
        %v1714 = vadd.f32 %v1586, %v1682
        %v1715 = vadd.f32 %v1587, %v1683
        %v1716 = vadd.f32 %v1588, %v1684
        %v1717 = vadd.f32 %v1589, %v1685
        %v1718 = vadd.f32 %v1590, %v1686
        %v1719 = vadd.f32 %v1591, %v1687
        %v1720 = vadd.f32 %v1592, %v1688
        %v1721 = vadd.f32 %v1593, %v1689
        %v1722 = vadd.f32 %v1594, %v1690
        %v1723 = vsub.f32 1.0, %v1691
        %v1724 = vsub.f32 1.0, %v1692
        %v1725 = vsub.f32 1.0, %v1693
        %v1726 = vsub.f32 1.0, %v1694
        %v1727 = vsub.f32 1.0, %v1695
        %v1728 = vsub.f32 1.0, %v1696
        %v1729 = vsub.f32 1.0, %v1697
        %v1730 = vsub.f32 1.0, %v1698
        %v1731 = vsub.f32 1.0, %v1699
        %v1732 = vsub.f32 1.0, %v1700
        %v1733 = vsub.f32 1.0, %v1701
        %v1734 = vsub.f32 1.0, %v1702
        %v1735 = vsub.f32 1.0, %v1703
        %v1736 = vsub.f32 1.0, %v1704
        %v1737 = vsub.f32 1.0, %v1705
        %v1738 = vsub.f32 1.0, %v1706
        %v1739 = vsub.f32 1.0, %v1707
        %v1740 = vsub.f32 1.0, %v1708
        %v1741 = vsub.f32 1.0, %v1709
        %v1742 = vsub.f32 1.0, %v1710
        %v1743 = vsub.f32 1.0, %v1711
        %v1744 = vsub.f32 1.0, %v1712
        %v1745 = vsub.f32 1.0, %v1713
        %v1746 = vsub.f32 1.0, %v1714
        %v1747 = vsub.f32 1.0, %v1715
        %v1748 = vsub.f32 1.0, %v1716
        %v1749 = vsub.f32 1.0, %v1717
        %v1750 = vsub.f32 1.0, %v1718
        %v1751 = vsub.f32 1.0, %v1719
        %v1752 = vsub.f32 1.0, %v1720
        %v1753 = vsub.f32 1.0, %v1721
        %v1754 = vsub.f32 1.0, %v1722
        %v1755 = vmul.f32 %v1051, 0.25
        %v1756 = vmul.f32 %v1052, 0.25
        %v1757 = vmul.f32 %v1053, 0.25
        %v1758 = vmul.f32 %v1054, 0.25
        %v1759 = vmul.f32 %v1055, 0.25
        %v1760 = vmul.f32 %v1056, 0.25
        %v1761 = vmul.f32 %v1057, 0.25
        %v1762 = vmul.f32 %v1058, 0.25
        %v1763 = vmul.f32 %v1059, 0.25
        %v1764 = vmul.f32 %v1060, 0.25
        %v1765 = vmul.f32 %v1061, 0.25
        %v1766 = vmul.f32 %v1062, 0.25
        %v1767 = vmul.f32 %v1063, 0.25
        %v1768 = vmul.f32 %v1064, 0.25
        %v1769 = vmul.f32 %v1065, 0.25
        %v1770 = vmul.f32 %v1066, 0.25
        %v1771 = vmul.f32 %v1067, 0.25
        %v1772 = vmul.f32 %v1068, 0.25
        %v1773 = vmul.f32 %v1069, 0.25
        %v1774 = vmul.f32 %v1070, 0.25
        %v1775 = vmul.f32 %v1071, 0.25
        %v1776 = vmul.f32 %v1072, 0.25
        %v1777 = vmul.f32 %v1073, 0.25
        %v1778 = vmul.f32 %v1074, 0.25
        %v1779 = vmul.f32 %v1075, 0.25
        %v1780 = vmul.f32 %v1076, 0.25
        %v1781 = vmul.f32 %v1077, 0.25
        %v1782 = vmul.f32 %v1078, 0.25
        %v1783 = vmul.f32 %v1079, 0.25
        %v1784 = vmul.f32 %v1080, 0.25
        %v1785 = vmul.f32 %v1081, 0.25
        %v1786 = vmul.f32 %v1082, 0.25
        %v1787 = vmul.f32 %v1627, 0.75
        %v1788 = vmul.f32 %v1628, 0.75
        %v1789 = vmul.f32 %v1629, 0.75
        %v1790 = vmul.f32 %v1630, 0.75
        %v1791 = vmul.f32 %v1631, 0.75
        %v1792 = vmul.f32 %v1632, 0.75
        %v1793 = vmul.f32 %v1633, 0.75
        %v1794 = vmul.f32 %v1634, 0.75
        %v1795 = vmul.f32 %v1635, 0.75
        %v1796 = vmul.f32 %v1636, 0.75
        %v1797 = vmul.f32 %v1637, 0.75
        %v1798 = vmul.f32 %v1638, 0.75
        %v1799 = vmul.f32 %v1639, 0.75
        %v1800 = vmul.f32 %v1640, 0.75
        %v1801 = vmul.f32 %v1641, 0.75
        %v1802 = vmul.f32 %v1642, 0.75
        %v1803 = vmul.f32 %v1643, 0.75
        %v1804 = vmul.f32 %v1644, 0.75
        %v1805 = vmul.f32 %v1645, 0.75
        %v1806 = vmul.f32 %v1646, 0.75
        %v1807 = vmul.f32 %v1647, 0.75
        %v1808 = vmul.f32 %v1648, 0.75
        %v1809 = vmul.f32 %v1649, 0.75
        %v1810 = vmul.f32 %v1650, 0.75
        %v1811 = vmul.f32 %v1651, 0.75
        %v1812 = vmul.f32 %v1652, 0.75
        %v1813 = vmul.f32 %v1653, 0.75
        %v1814 = vmul.f32 %v1654, 0.75
        %v1815 = vmul.f32 %v1655, 0.75
        %v1816 = vmul.f32 %v1656, 0.75
        %v1817 = vmul.f32 %v1657, 0.75
        %v1818 = vmul.f32 %v1658, 0.75
        %v1819 = vadd.f32 %v1755, %v1787
        %v1820 = vadd.f32 %v1756, %v1788
        %v1821 = vadd.f32 %v1757, %v1789
        %v1822 = vadd.f32 %v1758, %v1790
        %v1823 = vadd.f32 %v1759, %v1791
        %v1824 = vadd.f32 %v1760, %v1792
        %v1825 = vadd.f32 %v1761, %v1793
        %v1826 = vadd.f32 %v1762, %v1794
        %v1827 = vadd.f32 %v1763, %v1795
        %v1828 = vadd.f32 %v1764, %v1796
        %v1829 = vadd.f32 %v1765, %v1797
        %v1830 = vadd.f32 %v1766, %v1798
        %v1831 = vadd.f32 %v1767, %v1799
        %v1832 = vadd.f32 %v1768, %v1800
        %v1833 = vadd.f32 %v1769, %v1801
        %v1834 = vadd.f32 %v1770, %v1802
        %v1835 = vadd.f32 %v1771, %v1803
        %v1836 = vadd.f32 %v1772, %v1804
        %v1837 = vadd.f32 %v1773, %v1805
        %v1838 = vadd.f32 %v1774, %v1806
        %v1839 = vadd.f32 %v1775, %v1807
        %v1840 = vadd.f32 %v1776, %v1808
        %v1841 = vadd.f32 %v1777, %v1809
        %v1842 = vadd.f32 %v1778, %v1810
        %v1843 = vadd.f32 %v1779, %v1811
        %v1844 = vadd.f32 %v1780, %v1812
        %v1845 = vadd.f32 %v1781, %v1813
        %v1846 = vadd.f32 %v1782, %v1814
        %v1847 = vadd.f32 %v1783, %v1815
        %v1848 = vadd.f32 %v1784, %v1816
        %v1849 = vadd.f32 %v1785, %v1817
        %v1850 = vadd.f32 %v1786, %v1818
        %v1851 = vmul.f32 %v1819, %v1531
        %v1852 = vmul.f32 %v1820, %v1532
        %v1853 = vmul.f32 %v1821, %v1533
        %v1854 = vmul.f32 %v1822, %v1534
        %v1855 = vmul.f32 %v1823, %v1535
        %v1856 = vmul.f32 %v1824, %v1536
        %v1857 = vmul.f32 %v1825, %v1537
        %v1858 = vmul.f32 %v1826, %v1538
        %v1859 = vmul.f32 %v1827, %v1539
        %v1860 = vmul.f32 %v1828, %v1540
        %v1861 = vmul.f32 %v1829, %v1541
        %v1862 = vmul.f32 %v1830, %v1542
        %v1863 = vmul.f32 %v1831, %v1543
        %v1864 = vmul.f32 %v1832, %v1544
        %v1865 = vmul.f32 %v1833, %v1545
        %v1866 = vmul.f32 %v1834, %v1546
        %v1867 = vmul.f32 %v1835, %v1547
        %v1868 = vmul.f32 %v1836, %v1548
        %v1869 = vmul.f32 %v1837, %v1549
        %v1870 = vmul.f32 %v1838, %v1550
        %v1871 = vmul.f32 %v1839, %v1551
        %v1872 = vmul.f32 %v1840, %v1552
        %v1873 = vmul.f32 %v1841, %v1553
        %v1874 = vmul.f32 %v1842, %v1554
        %v1875 = vmul.f32 %v1843, %v1555
        %v1876 = vmul.f32 %v1844, %v1556
        %v1877 = vmul.f32 %v1845, %v1557
        %v1878 = vmul.f32 %v1846, %v1558
        %v1879 = vmul.f32 %v1847, %v1559
        %v1880 = vmul.f32 %v1848, %v1560
        %v1881 = vmul.f32 %v1849, %v1561
        %v1882 = vmul.f32 %v1850, %v1562
        %v1883 = vmul.f32 %v1851, %v1723
        %v1884 = vmul.f32 %v1852, %v1724
        %v1885 = vmul.f32 %v1853, %v1725
        %v1886 = vmul.f32 %v1854, %v1726
        %v1887 = vmul.f32 %v1855, %v1727
        %v1888 = vmul.f32 %v1856, %v1728
        %v1889 = vmul.f32 %v1857, %v1729
        %v1890 = vmul.f32 %v1858, %v1730
        %v1891 = vmul.f32 %v1859, %v1731
        %v1892 = vmul.f32 %v1860, %v1732
        %v1893 = vmul.f32 %v1861, %v1733
        %v1894 = vmul.f32 %v1862, %v1734
        %v1895 = vmul.f32 %v1863, %v1735
        %v1896 = vmul.f32 %v1864, %v1736
        %v1897 = vmul.f32 %v1865, %v1737
        %v1898 = vmul.f32 %v1866, %v1738
        %v1899 = vmul.f32 %v1867, %v1739
        %v1900 = vmul.f32 %v1868, %v1740
        %v1901 = vmul.f32 %v1869, %v1741
        %v1902 = vmul.f32 %v1870, %v1742
        %v1903 = vmul.f32 %v1871, %v1743
        %v1904 = vmul.f32 %v1872, %v1744
        %v1905 = vmul.f32 %v1873, %v1745
        %v1906 = vmul.f32 %v1874, %v1746
        %v1907 = vmul.f32 %v1875, %v1747
        %v1908 = vmul.f32 %v1876, %v1748
        %v1909 = vmul.f32 %v1877, %v1749
        %v1910 = vmul.f32 %v1878, %v1750
        %v1911 = vmul.f32 %v1879, %v1751
        %v1912 = vmul.f32 %v1880, %v1752
        %v1913 = vmul.f32 %v1881, %v1753
        %v1914 = vmul.f32 %v1882, %v1754
        %v1915 = vmul.f32 %v1883, %v1723
        %v1916 = vmul.f32 %v1884, %v1724
        %v1917 = vmul.f32 %v1885, %v1725
        %v1918 = vmul.f32 %v1886, %v1726
        %v1919 = vmul.f32 %v1887, %v1727
        %v1920 = vmul.f32 %v1888, %v1728
        %v1921 = vmul.f32 %v1889, %v1729
        %v1922 = vmul.f32 %v1890, %v1730
        %v1923 = vmul.f32 %v1891, %v1731
        %v1924 = vmul.f32 %v1892, %v1732
        %v1925 = vmul.f32 %v1893, %v1733
        %v1926 = vmul.f32 %v1894, %v1734
        %v1927 = vmul.f32 %v1895, %v1735
        %v1928 = vmul.f32 %v1896, %v1736
        %v1929 = vmul.f32 %v1897, %v1737
        %v1930 = vmul.f32 %v1898, %v1738
        %v1931 = vmul.f32 %v1899, %v1739
        %v1932 = vmul.f32 %v1900, %v1740
        %v1933 = vmul.f32 %v1901, %v1741
        %v1934 = vmul.f32 %v1902, %v1742
        %v1935 = vmul.f32 %v1903, %v1743
        %v1936 = vmul.f32 %v1904, %v1744
        %v1937 = vmul.f32 %v1905, %v1745
        %v1938 = vmul.f32 %v1906, %v1746
        %v1939 = vmul.f32 %v1907, %v1747
        %v1940 = vmul.f32 %v1908, %v1748
        %v1941 = vmul.f32 %v1909, %v1749
        %v1942 = vmul.f32 %v1910, %v1750
        %v1943 = vmul.f32 %v1911, %v1751
        %v1944 = vmul.f32 %v1912, %v1752
        %v1945 = vmul.f32 %v1913, %v1753
        %v1946 = vmul.f32 %v1914, %v1754
        %p1947 = scmp.ne.s32.totalorder %s27, 0
        // Predicated region
        $region49: #{tpu_custom_call.1} parent=35 // pred_check
          %p1948 = pneg %p1947
        $region50: #{tpu_custom_call.1} parent=35 // pred_check_branch
          %1950 = sbr.rel (%p1948) target = $region52
        $region51: #{tpu_custom_call.1} parent=35 // pred_region
          %v1951 = vld [vmem:[#allocation2] sm:$0xff]
          %v1952 = vld [vmem:[#allocation2 + $0x8] sm:$0xff]
          %v1953 = vld [vmem:[#allocation2 + $0x10] sm:$0xff]
          %v1954 = vld [vmem:[#allocation2 + $0x18] sm:$0xff]
          %vm1955 = vcmask 261120
          %v1956 = vsel %vm1955, %v1915, 0.0
          %v1957 = vsel %vm1955, %v1919, 0.0
          %v1958 = vadd.f32 %v1956, %v1957
          %v1959 = vsel %vm1955, %v1923, 0.0
          %v1960 = vadd.f32 %v1958, %v1959
          %v1961 = vsel %vm1955, %v1927, 0.0
          %v1962 = vadd.f32 %v1960, %v1961
          %v1963 = vsel %vm1955, %v1931, 0.0
          %v1964 = vadd.f32 %v1962, %v1963
          %v1965 = vsel %vm1955, %v1935, 0.0
          %v1966 = vadd.f32 %v1964, %v1965
          %v1967 = vsel %vm1955, %v1939, 0.0
          %v1968 = vadd.f32 %v1966, %v1967
          %v1969 = vsel %vm1955, %v1943, 0.0
          %v1970 = vadd.f32 %v1968, %v1969
          %v1971 = vsel %vm1955, %v1916, 0.0
          %v1972 = vsel %vm1955, %v1920, 0.0
          %v1973 = vadd.f32 %v1971, %v1972
          %v1974 = vsel %vm1955, %v1924, 0.0
          %v1975 = vadd.f32 %v1973, %v1974
          %v1976 = vsel %vm1955, %v1928, 0.0
          %v1977 = vadd.f32 %v1975, %v1976
          %v1978 = vsel %vm1955, %v1932, 0.0
          %v1979 = vadd.f32 %v1977, %v1978
          %v1980 = vsel %vm1955, %v1936, 0.0
          %v1981 = vadd.f32 %v1979, %v1980
          %v1982 = vsel %vm1955, %v1940, 0.0
          %v1983 = vadd.f32 %v1981, %v1982
          %v1984 = vsel %vm1955, %v1944, 0.0
          %v1985 = vadd.f32 %v1983, %v1984
          %v1986 = vsel %vm1955, %v1917, 0.0
          %v1987 = vsel %vm1955, %v1921, 0.0
          %v1988 = vadd.f32 %v1986, %v1987
          %v1989 = vsel %vm1955, %v1925, 0.0
          %v1990 = vadd.f32 %v1988, %v1989
          %v1991 = vsel %vm1955, %v1929, 0.0
          %v1992 = vadd.f32 %v1990, %v1991
          %v1993 = vsel %vm1955, %v1933, 0.0
          %v1994 = vadd.f32 %v1992, %v1993
          %v1995 = vsel %vm1955, %v1937, 0.0
          %v1996 = vadd.f32 %v1994, %v1995
          %v1997 = vsel %vm1955, %v1941, 0.0
          %v1998 = vadd.f32 %v1996, %v1997
          %v1999 = vsel %vm1955, %v1945, 0.0
          %v2000 = vadd.f32 %v1998, %v1999
          %v2001 = vsel %vm1955, %v1918, 0.0
          %v2002 = vsel %vm1955, %v1922, 0.0
          %v2003 = vadd.f32 %v2001, %v2002
          %v2004 = vsel %vm1955, %v1926, 0.0
          %v2005 = vadd.f32 %v2003, %v2004
          %v2006 = vsel %vm1955, %v1930, 0.0
          %v2007 = vadd.f32 %v2005, %v2006
          %v2008 = vsel %vm1955, %v1934, 0.0
          %v2009 = vadd.f32 %v2007, %v2008
          %v2010 = vsel %vm1955, %v1938, 0.0
          %v2011 = vadd.f32 %v2009, %v2010
          %v2012 = vsel %vm1955, %v1942, 0.0
          %v2013 = vadd.f32 %v2011, %v2012
          %v2014 = vsel %vm1955, %v1946, 0.0
          %v2015 = vadd.f32 %v2013, %v2014
          %v2016 = vadd.f32 %v1951, %v1970
          %v2017 = vadd.f32 %v1952, %v1985
          %v2018 = vadd.f32 %v1953, %v2000
          %v2019 = vadd.f32 %v1954, %v2015
          %2020 = vst.msk [vmem:[#allocation2] sm:$0xff] %vm1955, %v2016
          %2021 = vst.msk [vmem:[#allocation2 + $0x8] sm:$0xff] %vm1955, %v2017
          %2022 = vst.msk [vmem:[#allocation2 + $0x10] sm:$0xff] %vm1955, %v2018
          %2023 = vst.msk [vmem:[#allocation2 + $0x18] sm:$0xff] %vm1955, %v2019
        $region52: #{tpu_custom_call.1} parent=35 // pred_fallthru
          _
        %p2024 = scmp.eq.s32.totalorder %s27, 0
        // Predicated region
        $region53: #{tpu_custom_call.1} parent=35 // pred_check
          %p2025 = pneg %p2024
        $region54: #{tpu_custom_call.1} parent=35 // pred_check_branch
          %2027 = sbr.rel (%p2025) target = $region56
        $region55: #{tpu_custom_call.1} parent=35 // pred_region
          %v2028 = vld [vmem:[#allocation2] sm:$0xff]
          %v2029 = vld [vmem:[#allocation2 + $0x8] sm:$0xff]
          %v2030 = vld [vmem:[#allocation2 + $0x10] sm:$0xff]
          %v2031 = vld [vmem:[#allocation2 + $0x18] sm:$0xff]
          %vm2032 = vcmp.lt.s32.totalorder %v946, 4
          %vm2033 = vcmp.lt.s32.totalorder %v950, 4
          %vm2034 = vcmp.lt.s32.totalorder %v954, 4
          %vm2035 = vcmp.lt.s32.totalorder %v958, 4
          %vm2036 = vcmp.lt.s32.totalorder %v962, 4
          %vm2037 = vcmp.lt.s32.totalorder %v966, 4
          %vm2038 = vcmp.lt.s32.totalorder %v970, 4
          %vm2039 = vcmp.lt.s32.totalorder %v974, 4
          %v2040 = vsel %vm2032, 1, 0
          %v2041 = vsel %vm2033, 1, 0
          %v2042 = vsel %vm2034, 1, 0
          %v2043 = vsel %vm2035, 1, 0
          %v2044 = vsel %vm2036, 1, 0
          %v2045 = vsel %vm2037, 1, 0
          %v2046 = vsel %vm2038, 1, 0
          %v2047 = vsel %vm2039, 1, 0
          %vm2048 = vcmp.eq.s32.totalorder %v2040, 1
          %vm2049 = vcmp.eq.s32.totalorder %v2041, 1
          %vm2050 = vcmp.eq.s32.totalorder %v2042, 1
          %vm2051 = vcmp.eq.s32.totalorder %v2043, 1
          %vm2052 = vcmp.eq.s32.totalorder %v2044, 1
          %vm2053 = vcmp.eq.s32.totalorder %v2045, 1
          %vm2054 = vcmp.eq.s32.totalorder %v2046, 1
          %vm2055 = vcmp.eq.s32.totalorder %v2047, 1
          %v2056 = vsel %vm2048, %v1915, 0.0
          %v2057 = vsel %vm2048, %v1916, 0.0
          %v2058 = vsel %vm2048, %v1917, 0.0
          %v2059 = vsel %vm2048, %v1918, 0.0
          %v2060 = vsel %vm2049, %v1919, 0.0
          %v2061 = vsel %vm2049, %v1920, 0.0
          %v2062 = vsel %vm2049, %v1921, 0.0
          %v2063 = vsel %vm2049, %v1922, 0.0
          %v2064 = vsel %vm2050, %v1923, 0.0
          %v2065 = vsel %vm2050, %v1924, 0.0
          %v2066 = vsel %vm2050, %v1925, 0.0
          %v2067 = vsel %vm2050, %v1926, 0.0
          %v2068 = vsel %vm2051, %v1927, 0.0
          %v2069 = vsel %vm2051, %v1928, 0.0
          %v2070 = vsel %vm2051, %v1929, 0.0
          %v2071 = vsel %vm2051, %v1930, 0.0
          %v2072 = vsel %vm2052, %v1931, 0.0
          %v2073 = vsel %vm2052, %v1932, 0.0
          %v2074 = vsel %vm2052, %v1933, 0.0
          %v2075 = vsel %vm2052, %v1934, 0.0
          %v2076 = vsel %vm2053, %v1935, 0.0
          %v2077 = vsel %vm2053, %v1936, 0.0
          %v2078 = vsel %vm2053, %v1937, 0.0
          %v2079 = vsel %vm2053, %v1938, 0.0
          %v2080 = vsel %vm2054, %v1939, 0.0
          %v2081 = vsel %vm2054, %v1940, 0.0
          %v2082 = vsel %vm2054, %v1941, 0.0
          %v2083 = vsel %vm2054, %v1942, 0.0
          %v2084 = vsel %vm2055, %v1943, 0.0
          %v2085 = vsel %vm2055, %v1944, 0.0
          %v2086 = vsel %vm2055, %v1945, 0.0
          %v2087 = vsel %vm2055, %v1946, 0.0
          %vm2088 = vcmask 261120
          %v2089 = vsel %vm2088, %v2056, 0.0
          %v2090 = vsel %vm2088, %v2060, 0.0
          %v2091 = vadd.f32 %v2089, %v2090
          %v2092 = vsel %vm2088, %v2064, 0.0
          %v2093 = vadd.f32 %v2091, %v2092
          %v2094 = vsel %vm2088, %v2068, 0.0
          %v2095 = vadd.f32 %v2093, %v2094
          %v2096 = vsel %vm2088, %v2072, 0.0
          %v2097 = vadd.f32 %v2095, %v2096
          %v2098 = vsel %vm2088, %v2076, 0.0
          %v2099 = vadd.f32 %v2097, %v2098
          %v2100 = vsel %vm2088, %v2080, 0.0
          %v2101 = vadd.f32 %v2099, %v2100
          %v2102 = vsel %vm2088, %v2084, 0.0
          %v2103 = vadd.f32 %v2101, %v2102
          %v2104 = vsel %vm2088, %v2057, 0.0
          %v2105 = vsel %vm2088, %v2061, 0.0
          %v2106 = vadd.f32 %v2104, %v2105
          %v2107 = vsel %vm2088, %v2065, 0.0
          %v2108 = vadd.f32 %v2106, %v2107
          %v2109 = vsel %vm2088, %v2069, 0.0
          %v2110 = vadd.f32 %v2108, %v2109
          %v2111 = vsel %vm2088, %v2073, 0.0
          %v2112 = vadd.f32 %v2110, %v2111
          %v2113 = vsel %vm2088, %v2077, 0.0
          %v2114 = vadd.f32 %v2112, %v2113
          %v2115 = vsel %vm2088, %v2081, 0.0
          %v2116 = vadd.f32 %v2114, %v2115
          %v2117 = vsel %vm2088, %v2085, 0.0
          %v2118 = vadd.f32 %v2116, %v2117
          %v2119 = vsel %vm2088, %v2058, 0.0
          %v2120 = vsel %vm2088, %v2062, 0.0
          %v2121 = vadd.f32 %v2119, %v2120
          %v2122 = vsel %vm2088, %v2066, 0.0
          %v2123 = vadd.f32 %v2121, %v2122
          %v2124 = vsel %vm2088, %v2070, 0.0
          %v2125 = vadd.f32 %v2123, %v2124
          %v2126 = vsel %vm2088, %v2074, 0.0
          %v2127 = vadd.f32 %v2125, %v2126
          %v2128 = vsel %vm2088, %v2078, 0.0
          %v2129 = vadd.f32 %v2127, %v2128
          %v2130 = vsel %vm2088, %v2082, 0.0
          %v2131 = vadd.f32 %v2129, %v2130
          %v2132 = vsel %vm2088, %v2086, 0.0
          %v2133 = vadd.f32 %v2131, %v2132
          %v2134 = vsel %vm2088, %v2059, 0.0
          %v2135 = vsel %vm2088, %v2063, 0.0
          %v2136 = vadd.f32 %v2134, %v2135
          %v2137 = vsel %vm2088, %v2067, 0.0
          %v2138 = vadd.f32 %v2136, %v2137
          %v2139 = vsel %vm2088, %v2071, 0.0
          %v2140 = vadd.f32 %v2138, %v2139
          %v2141 = vsel %vm2088, %v2075, 0.0
          %v2142 = vadd.f32 %v2140, %v2141
          %v2143 = vsel %vm2088, %v2079, 0.0
          %v2144 = vadd.f32 %v2142, %v2143
          %v2145 = vsel %vm2088, %v2083, 0.0
          %v2146 = vadd.f32 %v2144, %v2145
          %v2147 = vsel %vm2088, %v2087, 0.0
          %v2148 = vadd.f32 %v2146, %v2147
          %v2149 = vadd.f32 %v2028, %v2103
          %v2150 = vadd.f32 %v2029, %v2118
          %v2151 = vadd.f32 %v2030, %v2133
          %v2152 = vadd.f32 %v2031, %v2148
          %2153 = vst.msk [vmem:[#allocation2] sm:$0xff] %vm2088, %v2149
          %2154 = vst.msk [vmem:[#allocation2 + $0x8] sm:$0xff] %vm2088, %v2150
          %2155 = vst.msk [vmem:[#allocation2 + $0x10] sm:$0xff] %vm2088, %v2151
          %2156 = vst.msk [vmem:[#allocation2 + $0x18] sm:$0xff] %vm2088, %v2152
        $region56: #{tpu_custom_call.1} parent=35 // pred_fallthru
          _
        // Predicated region
        $region57: #{tpu_custom_call.1} parent=35 // pred_check
          %p2157 = pneg %p315
        $region58: #{tpu_custom_call.1} parent=35 // pred_check_branch
          %2159 = sbr.rel (%p2157) target = $region60
        $region59: #{tpu_custom_call.1} parent=35 // pred_region
          %v2160 = vld [vmem:[#allocation2] sm:$0xff]
          %v2161 = vld [vmem:[#allocation2 + $0x8] sm:$0xff]
          %v2162 = vld [vmem:[#allocation2 + $0x10] sm:$0xff]
          %v2163 = vld [vmem:[#allocation2 + $0x18] sm:$0xff]
          %vm2164 = vcmask 261120
          %v2165 = vsel %vm2164, %v2160, 0.0
          %v2166 = vsel %vm2164, %v2161, 0.0
          %v2167 = vadd.f32 %v2165, %v2166
          %v2168 = vsel %vm2164, %v2162, 0.0
          %v2169 = vadd.f32 %v2167, %v2168
          %v2170 = vsel %vm2164, %v2163, 0.0
          %v2171 = vadd.f32 %v2169, %v2170
          %2172 = vadd.xlane.f32.xlu0 %v2171
          %v2173 = vpop.xlane.xlu0 %2172
          %v2174 = vrot.slane %v2173, 4
          %v2175 = vadd.f32 %v2173, %v2174
          %v2176 = vrot.slane %v2175, 2
          %v2177 = vadd.f32 %v2175, %v2176
          %v2178 = vrot.slane %v2177, 1
          %v2179 = vadd.f32 %v2177, %v2178
          %s2180 = vtos %v2179
          %s2181 = smul.f32 %s2180, 0.0009765625
          %v2182 = vstv %s2181
          %vm2183 = vcmask 0
          %2184 = vst.msk [vmem:[%s313] sm:$0x1] %vm2183, %v2182
        $region60: #{tpu_custom_call.1} parent=35 // pred_fallthru
          _
        %p2185 = scmp.lt.s32.totalorder %s26, 1
        %s2186 = scalar_select %p2185, %s26, 1
        %p2187 = scmp.lt.s32.totalorder %s27, 0
        %s2188 = scalar_select %p2187, %s27, 0
        %s2189 = sadd.s32 %s2188, %s2186
        %s2190 = scalar_lea.vmem %s4, %s2189
        // Predicated region
        $region61: #{tpu_custom_call.1} parent=35 // pred_check
          %p2191 = pneg %p163
        $region62: #{tpu_custom_call.1} parent=35 // pred_check_branch
          %2193 = sbr.rel (%p2191) target = $region64
        $region63: #{tpu_custom_call.1} parent=35 // pred_region
          _
        $region64: #{tpu_custom_call.1} parent=35 // pred_fallthru
          _
      $region36: #{tpu_custom_call.1} parent=5 // pred_fallthru
        _
      %p2194 = scmp.le.s32.totalorder 2, %s16
      // Predicated region
      $region65: #{tpu_custom_call.1} parent=5 // pred_check
        %p2195 = pneg %p2194
      $region66: #{tpu_custom_call.1} parent=5 // pred_check_branch
        %2197 = sbr.rel (%p2195) target = $region68
      $region67: #{tpu_custom_call.1} parent=5 // pred_region
        %s2198 = ssub.s32 %s16, 2
        // Predicated region
        $region69: #{tpu_custom_call.1} parent=67 // pred_check
          %p2199 = pneg %p169
        $region70: #{tpu_custom_call.1} parent=67 // pred_check_branch
          %2201 = sbr.rel (%p2199) target = $region72
        $region71: #{tpu_custom_call.1} parent=67 // pred_region
          %p2202 = scmp.lt.s32.totalorder %s29, 1
          %s2203 = scalar_select %p2202, %s29, 1
          %p2204 = scmp.lt.s32.totalorder %s30, 0
          %s2205 = scalar_select %p2204, %s30, 0
          %s2206 = sadd.s32 %s2205, %s2203
          %s2207 = scalar_lea.vmem %s4, %s2206
        $region72: #{tpu_custom_call.1} parent=67 // pred_fallthru
          _
      $region68: #{tpu_custom_call.1} parent=5 // pred_fallthru
        _
    $region6: #{tpu_custom_call.1} parent=1 // loop_footer
      %s20 = sadd.s32 1, %s16
    $region7: #{tpu_custom_call.1} parent=1 // loop_footer_branch
      %15 = sbr.rel target = $region3
    $region8: #{tpu_custom_call.1} parent=1 // loop_exit
      _
    %2208 = vsyncpa [#allocation4], 1
    %s2209 = scalar_lea.sflag [#allocation4], 1
    %2210 = vsyncpa %s2209, 1
    %2211 = vsyncpa [#allocation6], 1
    %s2212 = scalar_lea.sflag [#allocation6], 1
    %2213 = vsyncpa %s2212, 1

</llo_original>
